<compile_context>
chip_gen: v5e
topology: v5e:2x2
jax: 0.10.0
libtpu: 0.0.40
codegen_flags: <defaults>
</compile_context>

<pallas_src>
import functools

import jax
import jax.numpy as jnp
from jax import lax
from jax.experimental import pallas as pl
from jax.experimental.pallas import tpu as pltpu

LN_EPS = 1e-5  # torch.nn.LayerNorm default


# ----------------------------------------------------------------------------
# Kernel
# ----------------------------------------------------------------------------
def _interaction_kernel(x_ref, w1_ref, b1_ref, g_ref, beta_ref, w2_ref, b2_ref,
                        out_ref):
    x = x_ref[...].astype(jnp.float32)            # (bt, C)
    c = x.shape[-1]
    ch = c // 2
    x1 = x[:, :ch]
    x2 = x[:, ch:]
    mm_dtype = w1_ref.dtype                       # matmul dtype (f32 or bf16)

    def ln_relu(z, g, b):
        # Biased-variance LayerNorm (eps=1e-5), then ReLU.  f32 throughout.
        mu = jnp.mean(z, axis=-1, keepdims=True)
        var = jnp.mean(jnp.square(z - mu), axis=-1, keepdims=True)
        zn = (z - mu) * lax.rsqrt(var + LN_EPS)
        return jnp.maximum(zn * g + b, 0.0)

    def pair(p, h):
        # Fused first Linear of the (s, t) pair:  (bt, C/2) @ (C/2, 2C).
        z = jnp.dot(h.astype(mm_dtype), w1_ref[p],
                    preferred_element_type=jnp.float32) + b1_ref[p]
        # Per-net LayerNorm + ReLU on the two C-wide halves.
        zn_s = ln_relu(z[:, :c], g_ref[2 * p], beta_ref[2 * p])
        zn_t = ln_relu(z[:, c:], g_ref[2 * p + 1], beta_ref[2 * p + 1])
        # Second Linears: exact reference FLOPs, no concatenate / zero blocks.
        # scale_1 / scale_2 already folded into the s-net weights & bias.
        o_s = jnp.dot(zn_s.astype(mm_dtype), w2_ref[p, 0],
                      preferred_element_type=jnp.float32) + b2_ref[p, :ch]
        o_t = jnp.dot(zn_t.astype(mm_dtype), w2_ref[p, 1],
                      preferred_element_type=jnp.float32) + b2_ref[p, ch:]
        return o_s, o_t

    s1, t1 = pair(0, x2)
    y1 = x1 * jnp.exp(jnp.clip(s1, -5.0, 5.0)) + t1
    s2, t2 = pair(1, y1)
    y2 = x2 * jnp.exp(jnp.clip(s2, -5.0, 5.0)) + t2

    # Write the two halves directly into their lane ranges (no concat).
    out_ref[:, :ch] = y1.astype(out_ref.dtype)
    out_ref[:, ch:] = y2.astype(out_ref.dtype)


# ----------------------------------------------------------------------------
# pallas_call wrapper
# ----------------------------------------------------------------------------
@functools.partial(jax.jit, static_argnames=("block_b", "single_buffer_weights"))
def _interaction_call(x, w1, b1, gamma, beta, w2, b2, *, block_b,
                      single_buffer_weights):
    B, C = x.shape
    grid = (B // block_b,)

    def weight_spec(arr):
        nd = arr.ndim
        kwargs = {}
        if single_buffer_weights:
            # Grid-invariant operands: one VMEM buffer is enough (the constant
            # index_map never re-fetches).  Halves weight VMEM (key on v7x).
            kwargs["pipeline_mode"] = pl.Buffered(1)
        return pl.BlockSpec(arr.shape, lambda i: (0,) * nd, **kwargs)

    # Explicit VMEM budget: weights (+ double-buffer if applicable), the
    # double-buffered x/out row tiles, and generous f32-intermediate headroom.
    weight_bytes = sum(int(a.size) * a.dtype.itemsize
                       for a in (w1, b1, gamma, beta, w2, b2))
    weight_bytes *= 1 if single_buffer_weights else 2
    io_bytes = 2 * 2 * block_b * C * x.dtype.itemsize
    scratch_bytes = 16 * block_b * 2 * C * 4
    vmem_limit = int(max(32 << 20,
                         min(96 << 20,
                             weight_bytes + io_bytes + scratch_bytes + (4 << 20))))

    return pl.pallas_call(
        _interaction_kernel,
        out_shape=jax.ShapeDtypeStruct((B, C), x.dtype),
        grid_spec=pltpu.PrefetchScalarGridSpec(
            num_scalar_prefetch=0,
            grid=grid,
            in_specs=[
                pl.BlockSpec((block_b, C), lambda i: (i, 0)),   # x row tile
                weight_spec(w1), weight_spec(b1), weight_spec(gamma),
                weight_spec(beta), weight_spec(w2), weight_spec(b2),
            ],
            out_specs=pl.BlockSpec((block_b, C), lambda i: (i, 0)),
        ),
        compiler_params=pltpu.CompilerParams(
            dimension_semantics=("parallel",),
            vmem_limit_bytes=vmem_limit,
        ),
    )(x, w1, b1, gamma, beta, w2, b2)


_single_buffer_ok = None  # cached probe result for pl.Buffered(1) support


def _pick_block_b(B):
    # Prefer large row tiles (amortize per-grid-step overhead, keep the MXU
    # fed) while leaving >= 2 grid steps so the BlockSpec pipeline can overlap
    # DMAs and v7x's second TensorCore gets a share of the parallel grid.
    for cand in (1024, 512, 256, 128, 64, 32, 16, 8):
        if B % cand == 0 and B // cand >= 2:
            return cand
    return B


def interaction_block(x, fused_params, *, block_b=None):
    """x: (B, C) float32.  fused_params: output of fuse_params()."""
    global _single_buffer_ok
    B, C = x.shape
    assert C % 2 == 0
    if block_b is None:
        block_b = _pick_block_b(B)
    assert B % block_b == 0, (B, block_b)
    assert block_b % 8 == 0 or block_b == B, block_b

    args = (x, fused_params["w1"], fused_params["b1"], fused_params["gamma"],
            fused_params["beta"], fused_params["w2"], fused_params["b2"])

    if _single_buffer_ok is None:
        try:
            out = jax.block_until_ready(
                _interaction_call(*args, block_b=block_b,
                                  single_buffer_weights=True))
            _single_buffer_ok = True
            return out
        except Exception:
            # pl.Buffered(1) not supported by this JAX build; use default
            # (double-buffered) weight specs.
            _single_buffer_ok = False
    return _interaction_call(*args, block_b=block_b,
                             single_buffer_weights=_single_buffer_ok)


# ----------------------------------------------------------------------------
# Parameter handling
# ----------------------------------------------------------------------------
def fuse_params(params, matmul_dtype=jnp.float32):
    """One-time wrapper-side fusion of the 4 MLPs into 2 pair-fused MLPs.

    * first Linears of each (s, t) pair concatenated along the output axis
      -> w1 pair weight (C/2, 2C),
    * second Linears stacked per pair -> w2 (2, 2, C, C/2) (exact reference
      FLOPs, no block-diagonal zero padding),
    * scale_1 / scale_2 folded into the s-net second-layer weights/bias,
    * matmul weights optionally cast to bf16 (2x MXU rate on v6e/v7x).
    """
    w1, b1 = params["w1"], params["b1"]
    gamma, beta = params["gamma"], params["beta"]
    w2, b2 = params["w2"], params["b2"]
    scales = params["scales"]

    def fuse_pair(p):
        i_s, i_t = 2 * p, 2 * p + 1
        sc = scales[p]
        w1p = jnp.concatenate([w1[i_s], w1[i_t]], axis=1)        # (C/2, 2C)
        b1p = jnp.concatenate([b1[i_s], b1[i_t]], axis=0)        # (2C,)
        w2p = jnp.stack([w2[i_s] * sc, w2[i_t]], axis=0)         # (2, C, C/2)
        b2p = jnp.concatenate([b2[i_s] * sc, b2[i_t]], axis=0)   # (C,)
        return w1p, b1p, w2p, b2p

    w1a, b1a, w2a, b2a = fuse_pair(0)
    w1b, b1b, w2b, b2b = fuse_pair(1)
    return dict(
        w1=jnp.stack([w1a, w1b]).astype(matmul_dtype),   # (2, C/2, 2C)
        b1=jnp.stack([b1a, b1b]).astype(jnp.float32),    # (2, 2C)
        gamma=gamma.astype(jnp.float32),                 # (4, C) order [s1,t1,s2,t2]
        beta=beta.astype(jnp.float32),                   # (4, C)
        w2=jnp.stack([w2a, w2b]).astype(matmul_dtype),   # (2, 2, C, C/2)
        b2=jnp.stack([b2a, b2b]).astype(jnp.float32),    # (2, C)
    )


def init_params(key, channels):
    """Synthetic init matching the PyTorch module's shapes.

    Weights are stored transposed relative to torch.nn.Linear, i.e. w1[k] has
    shape (C//2, C) so that y = x @ w1 + b1.  Net order: [s1, t1, s2, t2].
    """
    c = channels
    ch = channels // 2
    ks = jax.random.split(key, 6)
    w1 = jax.random.normal(ks[0], (4, ch, c), dtype=jnp.float32) * 0.1
    w2 = jax.random.normal(ks[1], (4, c, ch), dtype=jnp.float32) * 0.1
    b1 = jax.random.normal(ks[2], (4, c), dtype=jnp.float32) * 0.1
    b2 = jax.random.normal(ks[3], (4, ch), dtype=jnp.float32) * 0.1
    gamma = 1.0 + 0.1 * jax.random.normal(ks[4], (4, c), dtype=jnp.float32)
    beta = 0.1 * jax.random.normal(ks[5], (4, c), dtype=jnp.float32)
    scales = jnp.array([0.1, 0.1], dtype=jnp.float32)  # scale_1, scale_2
    return dict(w1=w1, b1=b1, gamma=gamma, beta=beta, w2=w2, b2=b2,
                scales=scales)


def reference_forward(x, params):
    """Pure-JAX reference mirroring the PyTorch forward (un-fused weights)."""
    C = x.shape[-1]
    ch = C // 2

    def mlp(idx, h):
        z = h @ params["w1"][idx] + params["b1"][idx]
        mu = jnp.mean(z, -1, keepdims=True)
        var = jnp.mean((z - mu) ** 2, -1, keepdims=True)
        zn = (z - mu) / jnp.sqrt(var + LN_EPS)
        zn = zn * params["gamma"][idx] + params["beta"][idx]
        zn = jnp.maximum(zn, 0.0)
        return zn @ params["w2"][idx] + params["b2"][idx]

    x1, x2 = x[:, :ch], x[:, ch:]
    s1 = params["scales"][0] * mlp(0, x2)
    t1 = mlp(1, x2)
    y1 = x1 * jnp.exp(jnp.clip(s1, -5.0, 5.0)) + t1
    s2 = params["scales"][1] * mlp(2, y1)
    t2 = mlp(3, y1)
    y2 = x2 * jnp.exp(jnp.clip(s2, -5.0, 5.0)) + t2
    return jnp.concatenate([y1, y2], axis=-1)


if __name__ == "__main__":
    B, C = 128, 32  # small test shape; block_b=32 -> 4 pipelined grid steps
    key = jax.random.PRNGKey(0)
    kx, kp = jax.random.split(key)
    x = jax.random.normal(kx, (B, C), dtype=jnp.float32)
    params = init_params(kp, C)
    ref = reference_forward(x, params)

    # f32-matmul path: tight check against the un-fused reference.
    fused_f32 = fuse_params(params)
    out = jax.block_until_ready(interaction_block(x, fused_f32, block_b=32))
    assert out.shape == (B, C), out.shape
    assert jnp.allclose(out, ref, atol=1e-4, rtol=1e-4), (
        float(jnp.max(jnp.abs(out - ref))))

    # bf16-matmul path (2x MXU rate on v6e/v7x, half the weight VMEM): loose check.
    fused_bf16 = fuse_params(params, matmul_dtype=jnp.bfloat16)
    out_bf16 = jax.block_until_ready(interaction_block(x, fused_bf16, block_b=32))
    assert out_bf16.shape == (B, C)
    assert jnp.allclose(out_bf16, ref, atol=2e-1, rtol=2e-1), (
        float(jnp.max(jnp.abs(out_bf16 - ref))))

    print("KERNEL_OK")
</pallas_src>

<mosaic_0001>
module attributes {stable_mosaic.version = 11 : i64} {
  func.func @_interaction_kernel(%arg0: i32, %arg1: memref<32x32xf32, #tpu.memory_space<vmem>>, %arg2: memref<2x16x64xf32, #tpu.memory_space<vmem>>, %arg3: memref<2x64xf32, #tpu.memory_space<vmem>>, %arg4: memref<4x32xf32, #tpu.memory_space<vmem>>, %arg5: memref<4x32xf32, #tpu.memory_space<vmem>>, %arg6: memref<2x2x32x16xf32, #tpu.memory_space<vmem>>, %arg7: memref<2x32xf32, #tpu.memory_space<vmem>>, %arg8: memref<32x32xf32, #tpu.memory_space<vmem>>) attributes {dimension_semantics = [#tpu.dimension_semantics<parallel>], iteration_bounds = array<i64: 4>, scalar_prefetch = 0 : i64, scratch_operands = 0 : i64, tpu.core_type = #tpu.core_type<tc>, window_params = [{transform_indices = @transform_0, window_bounds = array<i64: 32, 32>}, {pipeline_mode = #tpu.pipeline_mode<synchronous>, transform_indices = @transform_1, window_bounds = array<i64: 2, 16, 64>}, {pipeline_mode = #tpu.pipeline_mode<synchronous>, transform_indices = @transform_2, window_bounds = array<i64: 2, 64>}, {pipeline_mode = #tpu.pipeline_mode<synchronous>, transform_indices = @transform_3, window_bounds = array<i64: 4, 32>}, {pipeline_mode = #tpu.pipeline_mode<synchronous>, transform_indices = @transform_4, window_bounds = array<i64: 4, 32>}, {pipeline_mode = #tpu.pipeline_mode<synchronous>, transform_indices = @transform_5, window_bounds = array<i64: 2, 2, 32, 16>}, {pipeline_mode = #tpu.pipeline_mode<synchronous>, transform_indices = @transform_6, window_bounds = array<i64: 2, 32>}, {transform_indices = @transform_7, window_bounds = array<i64: 32, 32>}]} {
    %c0 = arith.constant 0 : index
    %c0_0 = arith.constant 0 : index
    %0 = vector.load %arg1[%c0, %c0_0] : memref<32x32xf32, #tpu.memory_space<vmem>>, vector<32x32xf32>
    %1 = vector.extract_strided_slice %0 {offsets = [0, 0], sizes = [32, 16], strides = [1, 1]} : vector<32x32xf32> to vector<32x16xf32>
    %2 = vector.extract_strided_slice %0 {offsets = [0, 16], sizes = [32, 16], strides = [1, 1]} : vector<32x32xf32> to vector<32x16xf32>
    %c0_1 = arith.constant 0 : index
    %c0_2 = arith.constant 0 : index
    %c0_3 = arith.constant 0 : index
    %3 = vector.load %arg2[%c0_1, %c0_2, %c0_3] : memref<2x16x64xf32, #tpu.memory_space<vmem>>, vector<1x16x64xf32>
    %4 = vector.shape_cast %3 : vector<1x16x64xf32> to vector<16x64xf32>
    %cst = arith.constant dense<0.000000e+00> : vector<32x64xf32>
    %5 = tpu.matmul %2, %4, %cst {dimension_numbers = #tpu.dot_dimension_numbers<[1], [0], [0], [1], [0, 0, 1, 1], [], []>} : vector<32x16xf32>, vector<16x64xf32>, vector<32x64xf32> -> vector<32x64xf32>
    %c0_4 = arith.constant 0 : index
    %c0_5 = arith.constant 0 : index
    %6 = vector.load %arg3[%c0_4, %c0_5] : memref<2x64xf32, #tpu.memory_space<vmem>>, vector<1x64xf32>
    %7 = vector.shape_cast %6 : vector<1x64xf32> to vector<64xf32>
    %8 = vector.shape_cast %7 : vector<64xf32> to vector<1x64xf32>
    %9 = vector.broadcast %8 : vector<1x64xf32> to vector<32x64xf32>
    %10 = arith.addf %5, %9 : vector<32x64xf32>
    %11 = vector.extract_strided_slice %10 {offsets = [0, 0], sizes = [32, 32], strides = [1, 1]} : vector<32x64xf32> to vector<32x32xf32>
    %c0_6 = arith.constant 0 : index
    %c0_7 = arith.constant 0 : index
    %12 = vector.load %arg4[%c0_6, %c0_7] : memref<4x32xf32, #tpu.memory_space<vmem>>, vector<1x32xf32>
    %13 = vector.shape_cast %12 : vector<1x32xf32> to vector<32xf32>
    %c0_8 = arith.constant 0 : index
    %c0_9 = arith.constant 0 : index
    %14 = vector.load %arg5[%c0_8, %c0_9] : memref<4x32xf32, #tpu.memory_space<vmem>>, vector<1x32xf32>
    %15 = vector.shape_cast %14 : vector<1x32xf32> to vector<32xf32>
    %cst_10 = arith.constant dense<0.000000e+00> : vector<32xf32>
    %16 = vector.multi_reduction <add>, %11, %cst_10 [1] : vector<32x32xf32> to vector<32xf32>
    %17 = vector.shape_cast %16 : vector<32xf32> to vector<32x1xf32>
    %cst_11 = arith.constant 3.200000e+01 : f32
    %18 = vector.broadcast %cst_11 : f32 to vector<32x1xf32>
    %19 = arith.divf %17, %18 : vector<32x1xf32>
    %20 = vector.broadcast %19 : vector<32x1xf32> to vector<32x32xf32>
    %21 = arith.subf %11, %20 : vector<32x32xf32>
    %22 = arith.mulf %21, %21 : vector<32x32xf32>
    %cst_12 = arith.constant dense<0.000000e+00> : vector<32xf32>
    %23 = vector.multi_reduction <add>, %22, %cst_12 [1] : vector<32x32xf32> to vector<32xf32>
    %24 = vector.shape_cast %23 : vector<32xf32> to vector<32x1xf32>
    %cst_13 = arith.constant 3.200000e+01 : f32
    %25 = vector.broadcast %cst_13 : f32 to vector<32x1xf32>
    %26 = arith.divf %24, %25 : vector<32x1xf32>
    %27 = vector.broadcast %19 : vector<32x1xf32> to vector<32x32xf32>
    %28 = arith.subf %11, %27 : vector<32x32xf32>
    %cst_14 = arith.constant 9.99999974E-6 : f32
    %29 = vector.broadcast %cst_14 : f32 to vector<32x1xf32>
    %30 = arith.addf %26, %29 : vector<32x1xf32>
    %31 = math.rsqrt %30 : vector<32x1xf32>
    %32 = vector.broadcast %31 : vector<32x1xf32> to vector<32x32xf32>
    %33 = arith.mulf %28, %32 : vector<32x32xf32>
    %34 = vector.shape_cast %13 : vector<32xf32> to vector<1x32xf32>
    %35 = vector.broadcast %34 : vector<1x32xf32> to vector<32x32xf32>
    %36 = arith.mulf %33, %35 : vector<32x32xf32>
    %37 = vector.shape_cast %15 : vector<32xf32> to vector<1x32xf32>
    %38 = vector.broadcast %37 : vector<1x32xf32> to vector<32x32xf32>
    %39 = arith.addf %36, %38 : vector<32x32xf32>
    %cst_15 = arith.constant 0.000000e+00 : f32
    %40 = vector.broadcast %cst_15 : f32 to vector<32x32xf32>
    %41 = arith.maximumf %39, %40 : vector<32x32xf32>
    %42 = vector.extract_strided_slice %10 {offsets = [0, 32], sizes = [32, 32], strides = [1, 1]} : vector<32x64xf32> to vector<32x32xf32>
    %c1 = arith.constant 1 : index
    %c0_16 = arith.constant 0 : index
    %43 = vector.load %arg4[%c1, %c0_16] : memref<4x32xf32, #tpu.memory_space<vmem>>, vector<1x32xf32>
    %44 = vector.shape_cast %43 : vector<1x32xf32> to vector<32xf32>
    %c1_17 = arith.constant 1 : index
    %c0_18 = arith.constant 0 : index
    %45 = vector.load %arg5[%c1_17, %c0_18] : memref<4x32xf32, #tpu.memory_space<vmem>>, vector<1x32xf32>
    %46 = vector.shape_cast %45 : vector<1x32xf32> to vector<32xf32>
    %cst_19 = arith.constant dense<0.000000e+00> : vector<32xf32>
    %47 = vector.multi_reduction <add>, %42, %cst_19 [1] : vector<32x32xf32> to vector<32xf32>
    %48 = vector.shape_cast %47 : vector<32xf32> to vector<32x1xf32>
    %cst_20 = arith.constant 3.200000e+01 : f32
    %49 = vector.broadcast %cst_20 : f32 to vector<32x1xf32>
    %50 = arith.divf %48, %49 : vector<32x1xf32>
    %51 = vector.broadcast %50 : vector<32x1xf32> to vector<32x32xf32>
    %52 = arith.subf %42, %51 : vector<32x32xf32>
    %53 = arith.mulf %52, %52 : vector<32x32xf32>
    %cst_21 = arith.constant dense<0.000000e+00> : vector<32xf32>
    %54 = vector.multi_reduction <add>, %53, %cst_21 [1] : vector<32x32xf32> to vector<32xf32>
    %55 = vector.shape_cast %54 : vector<32xf32> to vector<32x1xf32>
    %cst_22 = arith.constant 3.200000e+01 : f32
    %56 = vector.broadcast %cst_22 : f32 to vector<32x1xf32>
    %57 = arith.divf %55, %56 : vector<32x1xf32>
    %58 = vector.broadcast %50 : vector<32x1xf32> to vector<32x32xf32>
    %59 = arith.subf %42, %58 : vector<32x32xf32>
    %cst_23 = arith.constant 9.99999974E-6 : f32
    %60 = vector.broadcast %cst_23 : f32 to vector<32x1xf32>
    %61 = arith.addf %57, %60 : vector<32x1xf32>
    %62 = math.rsqrt %61 : vector<32x1xf32>
    %63 = vector.broadcast %62 : vector<32x1xf32> to vector<32x32xf32>
    %64 = arith.mulf %59, %63 : vector<32x32xf32>
    %65 = vector.shape_cast %44 : vector<32xf32> to vector<1x32xf32>
    %66 = vector.broadcast %65 : vector<1x32xf32> to vector<32x32xf32>
    %67 = arith.mulf %64, %66 : vector<32x32xf32>
    %68 = vector.shape_cast %46 : vector<32xf32> to vector<1x32xf32>
    %69 = vector.broadcast %68 : vector<1x32xf32> to vector<32x32xf32>
    %70 = arith.addf %67, %69 : vector<32x32xf32>
    %cst_24 = arith.constant 0.000000e+00 : f32
    %71 = vector.broadcast %cst_24 : f32 to vector<32x32xf32>
    %72 = arith.maximumf %70, %71 : vector<32x32xf32>
    %c0_25 = arith.constant 0 : index
    %c0_26 = arith.constant 0 : index
    %c0_27 = arith.constant 0 : index
    %c0_28 = arith.constant 0 : index
    %73 = vector.load %arg6[%c0_25, %c0_26, %c0_27, %c0_28] : memref<2x2x32x16xf32, #tpu.memory_space<vmem>>, vector<1x1x32x16xf32>
    %74 = vector.shape_cast %73 : vector<1x1x32x16xf32> to vector<32x16xf32>
    %cst_29 = arith.constant dense<0.000000e+00> : vector<32x16xf32>
    %75 = tpu.matmul %41, %74, %cst_29 {dimension_numbers = #tpu.dot_dimension_numbers<[1], [0], [0], [1], [0, 0, 1, 1], [], []>} : vector<32x32xf32>, vector<32x16xf32>, vector<32x16xf32> -> vector<32x16xf32>
    %c0_30 = arith.constant 0 : index
    %c0_31 = arith.constant 0 : index
    %76 = vector.load %arg7[%c0_30, %c0_31] : memref<2x32xf32, #tpu.memory_space<vmem>>, vector<1x16xf32>
    %77 = vector.shape_cast %76 : vector<1x16xf32> to vector<16xf32>
    %78 = vector.shape_cast %77 : vector<16xf32> to vector<1x16xf32>
    %79 = vector.broadcast %78 : vector<1x16xf32> to vector<32x16xf32>
    %80 = arith.addf %75, %79 : vector<32x16xf32>
    %c0_32 = arith.constant 0 : index
    %c1_33 = arith.constant 1 : index
    %c0_34 = arith.constant 0 : index
    %c0_35 = arith.constant 0 : index
    %81 = vector.load %arg6[%c0_32, %c1_33, %c0_34, %c0_35] : memref<2x2x32x16xf32, #tpu.memory_space<vmem>>, vector<1x1x32x16xf32>
    %82 = vector.shape_cast %81 : vector<1x1x32x16xf32> to vector<32x16xf32>
    %cst_36 = arith.constant dense<0.000000e+00> : vector<32x16xf32>
    %83 = tpu.matmul %72, %82, %cst_36 {dimension_numbers = #tpu.dot_dimension_numbers<[1], [0], [0], [1], [0, 0, 1, 1], [], []>} : vector<32x32xf32>, vector<32x16xf32>, vector<32x16xf32> -> vector<32x16xf32>
    %c0_37 = arith.constant 0 : index
    %c16 = arith.constant 16 : index
    %84 = vector.load %arg7[%c0_37, %c16] : memref<2x32xf32, #tpu.memory_space<vmem>>, vector<1x16xf32>
    %85 = vector.shape_cast %84 : vector<1x16xf32> to vector<16xf32>
    %86 = vector.shape_cast %85 : vector<16xf32> to vector<1x16xf32>
    %87 = vector.broadcast %86 : vector<1x16xf32> to vector<32x16xf32>
    %88 = arith.addf %83, %87 : vector<32x16xf32>
    %cst_38 = arith.constant -5.000000e+00 : f32
    %cst_39 = arith.constant 5.000000e+00 : f32
    %89 = vector.broadcast %cst_38 : f32 to vector<32x16xf32>
    %90 = arith.maximumf %89, %80 : vector<32x16xf32>
    %91 = vector.broadcast %cst_39 : f32 to vector<32x16xf32>
    %92 = arith.minimumf %91, %90 : vector<32x16xf32>
    %93 = math.exp %92 : vector<32x16xf32>
    %94 = arith.mulf %1, %93 : vector<32x16xf32>
    %95 = arith.addf %94, %88 : vector<32x16xf32>
    %c1_40 = arith.constant 1 : index
    %c0_41 = arith.constant 0 : index
    %c0_42 = arith.constant 0 : index
    %96 = vector.load %arg2[%c1_40, %c0_41, %c0_42] : memref<2x16x64xf32, #tpu.memory_space<vmem>>, vector<1x16x64xf32>
    %97 = vector.shape_cast %96 : vector<1x16x64xf32> to vector<16x64xf32>
    %cst_43 = arith.constant dense<0.000000e+00> : vector<32x64xf32>
    %98 = tpu.matmul %95, %97, %cst_43 {dimension_numbers = #tpu.dot_dimension_numbers<[1], [0], [0], [1], [0, 0, 1, 1], [], []>} : vector<32x16xf32>, vector<16x64xf32>, vector<32x64xf32> -> vector<32x64xf32>
    %c1_44 = arith.constant 1 : index
    %c0_45 = arith.constant 0 : index
    %99 = vector.load %arg3[%c1_44, %c0_45] : memref<2x64xf32, #tpu.memory_space<vmem>>, vector<1x64xf32>
    %100 = vector.shape_cast %99 : vector<1x64xf32> to vector<64xf32>
    %101 = vector.shape_cast %100 : vector<64xf32> to vector<1x64xf32>
    %102 = vector.broadcast %101 : vector<1x64xf32> to vector<32x64xf32>
    %103 = arith.addf %98, %102 : vector<32x64xf32>
    %104 = vector.extract_strided_slice %103 {offsets = [0, 0], sizes = [32, 32], strides = [1, 1]} : vector<32x64xf32> to vector<32x32xf32>
    %c2 = arith.constant 2 : index
    %c0_46 = arith.constant 0 : index
    %105 = vector.load %arg4[%c2, %c0_46] : memref<4x32xf32, #tpu.memory_space<vmem>>, vector<1x32xf32>
    %106 = vector.shape_cast %105 : vector<1x32xf32> to vector<32xf32>
    %c2_47 = arith.constant 2 : index
    %c0_48 = arith.constant 0 : index
    %107 = vector.load %arg5[%c2_47, %c0_48] : memref<4x32xf32, #tpu.memory_space<vmem>>, vector<1x32xf32>
    %108 = vector.shape_cast %107 : vector<1x32xf32> to vector<32xf32>
    %cst_49 = arith.constant dense<0.000000e+00> : vector<32xf32>
    %109 = vector.multi_reduction <add>, %104, %cst_49 [1] : vector<32x32xf32> to vector<32xf32>
    %110 = vector.shape_cast %109 : vector<32xf32> to vector<32x1xf32>
    %cst_50 = arith.constant 3.200000e+01 : f32
    %111 = vector.broadcast %cst_50 : f32 to vector<32x1xf32>
    %112 = arith.divf %110, %111 : vector<32x1xf32>
    %113 = vector.broadcast %112 : vector<32x1xf32> to vector<32x32xf32>
    %114 = arith.subf %104, %113 : vector<32x32xf32>
    %115 = arith.mulf %114, %114 : vector<32x32xf32>
    %cst_51 = arith.constant dense<0.000000e+00> : vector<32xf32>
    %116 = vector.multi_reduction <add>, %115, %cst_51 [1] : vector<32x32xf32> to vector<32xf32>
    %117 = vector.shape_cast %116 : vector<32xf32> to vector<32x1xf32>
    %cst_52 = arith.constant 3.200000e+01 : f32
    %118 = vector.broadcast %cst_52 : f32 to vector<32x1xf32>
    %119 = arith.divf %117, %118 : vector<32x1xf32>
    %120 = vector.broadcast %112 : vector<32x1xf32> to vector<32x32xf32>
    %121 = arith.subf %104, %120 : vector<32x32xf32>
    %cst_53 = arith.constant 9.99999974E-6 : f32
    %122 = vector.broadcast %cst_53 : f32 to vector<32x1xf32>
    %123 = arith.addf %119, %122 : vector<32x1xf32>
    %124 = math.rsqrt %123 : vector<32x1xf32>
    %125 = vector.broadcast %124 : vector<32x1xf32> to vector<32x32xf32>
    %126 = arith.mulf %121, %125 : vector<32x32xf32>
    %127 = vector.shape_cast %106 : vector<32xf32> to vector<1x32xf32>
    %128 = vector.broadcast %127 : vector<1x32xf32> to vector<32x32xf32>
    %129 = arith.mulf %126, %128 : vector<32x32xf32>
    %130 = vector.shape_cast %108 : vector<32xf32> to vector<1x32xf32>
    %131 = vector.broadcast %130 : vector<1x32xf32> to vector<32x32xf32>
    %132 = arith.addf %129, %131 : vector<32x32xf32>
    %cst_54 = arith.constant 0.000000e+00 : f32
    %133 = vector.broadcast %cst_54 : f32 to vector<32x32xf32>
    %134 = arith.maximumf %132, %133 : vector<32x32xf32>
    %135 = vector.extract_strided_slice %103 {offsets = [0, 32], sizes = [32, 32], strides = [1, 1]} : vector<32x64xf32> to vector<32x32xf32>
    %c3 = arith.constant 3 : index
    %c0_55 = arith.constant 0 : index
    %136 = vector.load %arg4[%c3, %c0_55] : memref<4x32xf32, #tpu.memory_space<vmem>>, vector<1x32xf32>
    %137 = vector.shape_cast %136 : vector<1x32xf32> to vector<32xf32>
    %c3_56 = arith.constant 3 : index
    %c0_57 = arith.constant 0 : index
    %138 = vector.load %arg5[%c3_56, %c0_57] : memref<4x32xf32, #tpu.memory_space<vmem>>, vector<1x32xf32>
    %139 = vector.shape_cast %138 : vector<1x32xf32> to vector<32xf32>
    %cst_58 = arith.constant dense<0.000000e+00> : vector<32xf32>
    %140 = vector.multi_reduction <add>, %135, %cst_58 [1] : vector<32x32xf32> to vector<32xf32>
    %141 = vector.shape_cast %140 : vector<32xf32> to vector<32x1xf32>
    %cst_59 = arith.constant 3.200000e+01 : f32
    %142 = vector.broadcast %cst_59 : f32 to vector<32x1xf32>
    %143 = arith.divf %141, %142 : vector<32x1xf32>
    %144 = vector.broadcast %143 : vector<32x1xf32> to vector<32x32xf32>
    %145 = arith.subf %135, %144 : vector<32x32xf32>
    %146 = arith.mulf %145, %145 : vector<32x32xf32>
    %cst_60 = arith.constant dense<0.000000e+00> : vector<32xf32>
    %147 = vector.multi_reduction <add>, %146, %cst_60 [1] : vector<32x32xf32> to vector<32xf32>
    %148 = vector.shape_cast %147 : vector<32xf32> to vector<32x1xf32>
    %cst_61 = arith.constant 3.200000e+01 : f32
    %149 = vector.broadcast %cst_61 : f32 to vector<32x1xf32>
    %150 = arith.divf %148, %149 : vector<32x1xf32>
    %151 = vector.broadcast %143 : vector<32x1xf32> to vector<32x32xf32>
    %152 = arith.subf %135, %151 : vector<32x32xf32>
    %cst_62 = arith.constant 9.99999974E-6 : f32
    %153 = vector.broadcast %cst_62 : f32 to vector<32x1xf32>
    %154 = arith.addf %150, %153 : vector<32x1xf32>
    %155 = math.rsqrt %154 : vector<32x1xf32>
    %156 = vector.broadcast %155 : vector<32x1xf32> to vector<32x32xf32>
    %157 = arith.mulf %152, %156 : vector<32x32xf32>
    %158 = vector.shape_cast %137 : vector<32xf32> to vector<1x32xf32>
    %159 = vector.broadcast %158 : vector<1x32xf32> to vector<32x32xf32>
    %160 = arith.mulf %157, %159 : vector<32x32xf32>
    %161 = vector.shape_cast %139 : vector<32xf32> to vector<1x32xf32>
    %162 = vector.broadcast %161 : vector<1x32xf32> to vector<32x32xf32>
    %163 = arith.addf %160, %162 : vector<32x32xf32>
    %cst_63 = arith.constant 0.000000e+00 : f32
    %164 = vector.broadcast %cst_63 : f32 to vector<32x32xf32>
    %165 = arith.maximumf %163, %164 : vector<32x32xf32>
    %c1_64 = arith.constant 1 : index
    %c0_65 = arith.constant 0 : index
    %c0_66 = arith.constant 0 : index
    %c0_67 = arith.constant 0 : index
    %166 = vector.load %arg6[%c1_64, %c0_65, %c0_66, %c0_67] : memref<2x2x32x16xf32, #tpu.memory_space<vmem>>, vector<1x1x32x16xf32>
    %167 = vector.shape_cast %166 : vector<1x1x32x16xf32> to vector<32x16xf32>
    %cst_68 = arith.constant dense<0.000000e+00> : vector<32x16xf32>
    %168 = tpu.matmul %134, %167, %cst_68 {dimension_numbers = #tpu.dot_dimension_numbers<[1], [0], [0], [1], [0, 0, 1, 1], [], []>} : vector<32x32xf32>, vector<32x16xf32>, vector<32x16xf32> -> vector<32x16xf32>
    %c1_69 = arith.constant 1 : index
    %c0_70 = arith.constant 0 : index
    %169 = vector.load %arg7[%c1_69, %c0_70] : memref<2x32xf32, #tpu.memory_space<vmem>>, vector<1x16xf32>
    %170 = vector.shape_cast %169 : vector<1x16xf32> to vector<16xf32>
    %171 = vector.shape_cast %170 : vector<16xf32> to vector<1x16xf32>
    %172 = vector.broadcast %171 : vector<1x16xf32> to vector<32x16xf32>
    %173 = arith.addf %168, %172 : vector<32x16xf32>
    %c1_71 = arith.constant 1 : index
    %c1_72 = arith.constant 1 : index
    %c0_73 = arith.constant 0 : index
    %c0_74 = arith.constant 0 : index
    %174 = vector.load %arg6[%c1_71, %c1_72, %c0_73, %c0_74] : memref<2x2x32x16xf32, #tpu.memory_space<vmem>>, vector<1x1x32x16xf32>
    %175 = vector.shape_cast %174 : vector<1x1x32x16xf32> to vector<32x16xf32>
    %cst_75 = arith.constant dense<0.000000e+00> : vector<32x16xf32>
    %176 = tpu.matmul %165, %175, %cst_75 {dimension_numbers = #tpu.dot_dimension_numbers<[1], [0], [0], [1], [0, 0, 1, 1], [], []>} : vector<32x32xf32>, vector<32x16xf32>, vector<32x16xf32> -> vector<32x16xf32>
    %c1_76 = arith.constant 1 : index
    %c16_77 = arith.constant 16 : index
    %177 = vector.load %arg7[%c1_76, %c16_77] : memref<2x32xf32, #tpu.memory_space<vmem>>, vector<1x16xf32>
    %178 = vector.shape_cast %177 : vector<1x16xf32> to vector<16xf32>
    %179 = vector.shape_cast %178 : vector<16xf32> to vector<1x16xf32>
    %180 = vector.broadcast %179 : vector<1x16xf32> to vector<32x16xf32>
    %181 = arith.addf %176, %180 : vector<32x16xf32>
    %cst_78 = arith.constant -5.000000e+00 : f32
    %cst_79 = arith.constant 5.000000e+00 : f32
    %182 = vector.broadcast %cst_78 : f32 to vector<32x16xf32>
    %183 = arith.maximumf %182, %173 : vector<32x16xf32>
    %184 = vector.broadcast %cst_79 : f32 to vector<32x16xf32>
    %185 = arith.minimumf %184, %183 : vector<32x16xf32>
    %186 = math.exp %185 : vector<32x16xf32>
    %187 = arith.mulf %2, %186 : vector<32x16xf32>
    %188 = arith.addf %187, %181 : vector<32x16xf32>
    %c0_80 = arith.constant 0 : index
    %c0_81 = arith.constant 0 : index
    %189 = vector.load %arg8[%c0_80, %c0_81] : memref<32x32xf32, #tpu.memory_space<vmem>>, vector<32x16xf32>
    tpu.vector_store %arg8[%c0_80, %c0_81], %95 {strides = array<i32>} : memref<32x32xf32, #tpu.memory_space<vmem>>, vector<32x16xf32>,
    %c0_82 = arith.constant 0 : index
    %c16_83 = arith.constant 16 : index
    %190 = vector.load %arg8[%c0_82, %c16_83] : memref<32x32xf32, #tpu.memory_space<vmem>>, vector<32x16xf32>
    tpu.vector_store %arg8[%c0_82, %c16_83], %188 {strides = array<i32>} : memref<32x32xf32, #tpu.memory_space<vmem>>, vector<32x16xf32>,
    return
  }
  func.func @transform_0(%arg0: i32) -> (i32, i32) {
    %c0_i32 = arith.constant 0 : i32
    %c0_i32_0 = arith.constant 0 : i32
    return %arg0, %c0_i32 : i32, i32
  }
  func.func @transform_1(%arg0: i32) -> (i32, i32, i32) {
    %c0_i32 = arith.constant 0 : i32
    %c0_i32_0 = arith.constant 0 : i32
    %c0_i32_1 = arith.constant 0 : i32
    %c0_i32_2 = arith.constant 0 : i32
    return %c0_i32, %c0_i32_0, %c0_i32_1 : i32, i32, i32
  }
  func.func @transform_2(%arg0: i32) -> (i32, i32) {
    %c0_i32 = arith.constant 0 : i32
    %c0_i32_0 = arith.constant 0 : i32
    %c0_i32_1 = arith.constant 0 : i32
    return %c0_i32, %c0_i32_0 : i32, i32
  }
  func.func @transform_3(%arg0: i32) -> (i32, i32) {
    %c0_i32 = arith.constant 0 : i32
    %c0_i32_0 = arith.constant 0 : i32
    %c0_i32_1 = arith.constant 0 : i32
    return %c0_i32, %c0_i32_0 : i32, i32
  }
  func.func @transform_4(%arg0: i32) -> (i32, i32) {
    %c0_i32 = arith.constant 0 : i32
    %c0_i32_0 = arith.constant 0 : i32
    %c0_i32_1 = arith.constant 0 : i32
    return %c0_i32, %c0_i32_0 : i32, i32
  }
  func.func @transform_5(%arg0: i32) -> (i32, i32, i32, i32) {
    %c0_i32 = arith.constant 0 : i32
    %c0_i32_0 = arith.constant 0 : i32
    %c0_i32_1 = arith.constant 0 : i32
    %c0_i32_2 = arith.constant 0 : i32
    %c0_i32_3 = arith.constant 0 : i32
    return %c0_i32, %c0_i32_0, %c0_i32_1, %c0_i32_2 : i32, i32, i32, i32
  }
  func.func @transform_6(%arg0: i32) -> (i32, i32) {
    %c0_i32 = arith.constant 0 : i32
    %c0_i32_0 = arith.constant 0 : i32
    %c0_i32_1 = arith.constant 0 : i32
    return %c0_i32, %c0_i32_0 : i32, i32
  }
  func.func @transform_7(%arg0: i32) -> (i32, i32) {
    %c0_i32 = arith.constant 0 : i32
    %c0_i32_0 = arith.constant 0 : i32
    return %arg0, %c0_i32 : i32, i32
  }
}

module attributes {stable_mosaic.version = 11 : i64} {
  func.func @_interaction_kernel(%arg0: i32, %arg1: memref<32x32xf32, #tpu.memory_space<vmem>>, %arg2: memref<2x16x64xf32, #tpu.memory_space<vmem>>, %arg3: memref<2x64xf32, #tpu.memory_space<vmem>>, %arg4: memref<4x32xf32, #tpu.memory_space<vmem>>, %arg5: memref<4x32xf32, #tpu.memory_space<vmem>>, %arg6: memref<2x2x32x16xf32, #tpu.memory_space<vmem>>, %arg7: memref<2x32xf32, #tpu.memory_space<vmem>>, %arg8: memref<32x32xf32, #tpu.memory_space<vmem>>) attributes {dimension_semantics = [#tpu.dimension_semantics<parallel>], iteration_bounds = array<i64: 4>, scalar_prefetch = 0 : i64, scratch_operands = 0 : i64, tpu.core_type = #tpu.core_type<tc>, window_params = [{transform_indices = @transform_0, window_bounds = array<i64: 32, 32>}, {pipeline_mode = #tpu.pipeline_mode<synchronous>, transform_indices = @transform_1, window_bounds = array<i64: 2, 16, 64>}, {pipeline_mode = #tpu.pipeline_mode<synchronous>, transform_indices = @transform_2, window_bounds = array<i64: 2, 64>}, {pipeline_mode = #tpu.pipeline_mode<synchronous>, transform_indices = @transform_3, window_bounds = array<i64: 4, 32>}, {pipeline_mode = #tpu.pipeline_mode<synchronous>, transform_indices = @transform_4, window_bounds = array<i64: 4, 32>}, {pipeline_mode = #tpu.pipeline_mode<synchronous>, transform_indices = @transform_5, window_bounds = array<i64: 2, 2, 32, 16>}, {pipeline_mode = #tpu.pipeline_mode<synchronous>, transform_indices = @transform_6, window_bounds = array<i64: 2, 32>}, {transform_indices = @transform_7, window_bounds = array<i64: 32, 32>}]} {
    %c0 = arith.constant 0 : index
    %c0_0 = arith.constant 0 : index
    %0 = vector.load %arg1[%c0, %c0_0] : memref<32x32xf32, #tpu.memory_space<vmem>>, vector<32x32xf32>
    %1 = vector.extract_strided_slice %0 {offsets = [0, 0], sizes = [32, 16], strides = [1, 1]} : vector<32x32xf32> to vector<32x16xf32>
    %2 = vector.extract_strided_slice %0 {offsets = [0, 16], sizes = [32, 16], strides = [1, 1]} : vector<32x32xf32> to vector<32x16xf32>
    %c0_1 = arith.constant 0 : index
    %c0_2 = arith.constant 0 : index
    %c0_3 = arith.constant 0 : index
    %3 = vector.load %arg2[%c0_1, %c0_2, %c0_3] : memref<2x16x64xf32, #tpu.memory_space<vmem>>, vector<1x16x64xf32>
    %4 = vector.shape_cast %3 : vector<1x16x64xf32> to vector<16x64xf32>
    %cst = arith.constant dense<0.000000e+00> : vector<32x64xf32>
    %5 = tpu.matmul %2, %4, %cst {dimension_numbers = #tpu.dot_dimension_numbers<[1], [0], [0], [1], [0, 0, 1, 1], [], []>} : vector<32x16xf32>, vector<16x64xf32>, vector<32x64xf32> -> vector<32x64xf32>
    %c0_4 = arith.constant 0 : index
    %c0_5 = arith.constant 0 : index
    %6 = vector.load %arg3[%c0_4, %c0_5] : memref<2x64xf32, #tpu.memory_space<vmem>>, vector<1x64xf32>
    %7 = vector.shape_cast %6 : vector<1x64xf32> to vector<64xf32>
    %8 = vector.shape_cast %7 : vector<64xf32> to vector<1x64xf32>
    %9 = vector.broadcast %8 : vector<1x64xf32> to vector<32x64xf32>
    %10 = arith.addf %5, %9 : vector<32x64xf32>
    %11 = vector.extract_strided_slice %10 {offsets = [0, 0], sizes = [32, 32], strides = [1, 1]} : vector<32x64xf32> to vector<32x32xf32>
    %c0_6 = arith.constant 0 : index
    %c0_7 = arith.constant 0 : index
    %12 = vector.load %arg4[%c0_6, %c0_7] : memref<4x32xf32, #tpu.memory_space<vmem>>, vector<1x32xf32>
    %13 = vector.shape_cast %12 : vector<1x32xf32> to vector<32xf32>
    %c0_8 = arith.constant 0 : index
    %c0_9 = arith.constant 0 : index
    %14 = vector.load %arg5[%c0_8, %c0_9] : memref<4x32xf32, #tpu.memory_space<vmem>>, vector<1x32xf32>
    %15 = vector.shape_cast %14 : vector<1x32xf32> to vector<32xf32>
    %cst_10 = arith.constant dense<0.000000e+00> : vector<32xf32>
    %16 = vector.multi_reduction <add>, %11, %cst_10 [1] : vector<32x32xf32> to vector<32xf32>
    %17 = vector.shape_cast %16 : vector<32xf32> to vector<32x1xf32>
    %cst_11 = arith.constant 3.200000e+01 : f32
    %18 = vector.broadcast %cst_11 : f32 to vector<32x1xf32>
    %19 = arith.divf %17, %18 : vector<32x1xf32>
    %20 = vector.broadcast %19 : vector<32x1xf32> to vector<32x32xf32>
    %21 = arith.subf %11, %20 : vector<32x32xf32>
    %22 = arith.mulf %21, %21 : vector<32x32xf32>
    %cst_12 = arith.constant dense<0.000000e+00> : vector<32xf32>
    %23 = vector.multi_reduction <add>, %22, %cst_12 [1] : vector<32x32xf32> to vector<32xf32>
    %24 = vector.shape_cast %23 : vector<32xf32> to vector<32x1xf32>
    %cst_13 = arith.constant 3.200000e+01 : f32
    %25 = vector.broadcast %cst_13 : f32 to vector<32x1xf32>
    %26 = arith.divf %24, %25 : vector<32x1xf32>
    %27 = vector.broadcast %19 : vector<32x1xf32> to vector<32x32xf32>
    %28 = arith.subf %11, %27 : vector<32x32xf32>
    %cst_14 = arith.constant 9.99999974E-6 : f32
    %29 = vector.broadcast %cst_14 : f32 to vector<32x1xf32>
    %30 = arith.addf %26, %29 : vector<32x1xf32>
    %31 = math.rsqrt %30 : vector<32x1xf32>
    %32 = vector.broadcast %31 : vector<32x1xf32> to vector<32x32xf32>
    %33 = arith.mulf %28, %32 : vector<32x32xf32>
    %34 = vector.shape_cast %13 : vector<32xf32> to vector<1x32xf32>
    %35 = vector.broadcast %34 : vector<1x32xf32> to vector<32x32xf32>
    %36 = arith.mulf %33, %35 : vector<32x32xf32>
    %37 = vector.shape_cast %15 : vector<32xf32> to vector<1x32xf32>
    %38 = vector.broadcast %37 : vector<1x32xf32> to vector<32x32xf32>
    %39 = arith.addf %36, %38 : vector<32x32xf32>
    %cst_15 = arith.constant 0.000000e+00 : f32
    %40 = vector.broadcast %cst_15 : f32 to vector<32x32xf32>
    %41 = arith.maximumf %39, %40 : vector<32x32xf32>
    %42 = vector.extract_strided_slice %10 {offsets = [0, 32], sizes = [32, 32], strides = [1, 1]} : vector<32x64xf32> to vector<32x32xf32>
    %c1 = arith.constant 1 : index
    %c0_16 = arith.constant 0 : index
    %43 = vector.load %arg4[%c1, %c0_16] : memref<4x32xf32, #tpu.memory_space<vmem>>, vector<1x32xf32>
    %44 = vector.shape_cast %43 : vector<1x32xf32> to vector<32xf32>
    %c1_17 = arith.constant 1 : index
    %c0_18 = arith.constant 0 : index
    %45 = vector.load %arg5[%c1_17, %c0_18] : memref<4x32xf32, #tpu.memory_space<vmem>>, vector<1x32xf32>
    %46 = vector.shape_cast %45 : vector<1x32xf32> to vector<32xf32>
    %cst_19 = arith.constant dense<0.000000e+00> : vector<32xf32>
    %47 = vector.multi_reduction <add>, %42, %cst_19 [1] : vector<32x32xf32> to vector<32xf32>
    %48 = vector.shape_cast %47 : vector<32xf32> to vector<32x1xf32>
    %cst_20 = arith.constant 3.200000e+01 : f32
    %49 = vector.broadcast %cst_20 : f32 to vector<32x1xf32>
    %50 = arith.divf %48, %49 : vector<32x1xf32>
    %51 = vector.broadcast %50 : vector<32x1xf32> to vector<32x32xf32>
    %52 = arith.subf %42, %51 : vector<32x32xf32>
    %53 = arith.mulf %52, %52 : vector<32x32xf32>
    %cst_21 = arith.constant dense<0.000000e+00> : vector<32xf32>
    %54 = vector.multi_reduction <add>, %53, %cst_21 [1] : vector<32x32xf32> to vector<32xf32>
    %55 = vector.shape_cast %54 : vector<32xf32> to vector<32x1xf32>
    %cst_22 = arith.constant 3.200000e+01 : f32
    %56 = vector.broadcast %cst_22 : f32 to vector<32x1xf32>
    %57 = arith.divf %55, %56 : vector<32x1xf32>
    %58 = vector.broadcast %50 : vector<32x1xf32> to vector<32x32xf32>
    %59 = arith.subf %42, %58 : vector<32x32xf32>
    %cst_23 = arith.constant 9.99999974E-6 : f32
    %60 = vector.broadcast %cst_23 : f32 to vector<32x1xf32>
    %61 = arith.addf %57, %60 : vector<32x1xf32>
    %62 = math.rsqrt %61 : vector<32x1xf32>
    %63 = vector.broadcast %62 : vector<32x1xf32> to vector<32x32xf32>
    %64 = arith.mulf %59, %63 : vector<32x32xf32>
    %65 = vector.shape_cast %44 : vector<32xf32> to vector<1x32xf32>
    %66 = vector.broadcast %65 : vector<1x32xf32> to vector<32x32xf32>
    %67 = arith.mulf %64, %66 : vector<32x32xf32>
    %68 = vector.shape_cast %46 : vector<32xf32> to vector<1x32xf32>
    %69 = vector.broadcast %68 : vector<1x32xf32> to vector<32x32xf32>
    %70 = arith.addf %67, %69 : vector<32x32xf32>
    %cst_24 = arith.constant 0.000000e+00 : f32
    %71 = vector.broadcast %cst_24 : f32 to vector<32x32xf32>
    %72 = arith.maximumf %70, %71 : vector<32x32xf32>
    %c0_25 = arith.constant 0 : index
    %c0_26 = arith.constant 0 : index
    %c0_27 = arith.constant 0 : index
    %c0_28 = arith.constant 0 : index
    %73 = vector.load %arg6[%c0_25, %c0_26, %c0_27, %c0_28] : memref<2x2x32x16xf32, #tpu.memory_space<vmem>>, vector<1x1x32x16xf32>
    %74 = vector.shape_cast %73 : vector<1x1x32x16xf32> to vector<32x16xf32>
    %cst_29 = arith.constant dense<0.000000e+00> : vector<32x16xf32>
    %75 = tpu.matmul %41, %74, %cst_29 {dimension_numbers = #tpu.dot_dimension_numbers<[1], [0], [0], [1], [0, 0, 1, 1], [], []>} : vector<32x32xf32>, vector<32x16xf32>, vector<32x16xf32> -> vector<32x16xf32>
    %c0_30 = arith.constant 0 : index
    %c0_31 = arith.constant 0 : index
    %76 = vector.load %arg7[%c0_30, %c0_31] : memref<2x32xf32, #tpu.memory_space<vmem>>, vector<1x16xf32>
    %77 = vector.shape_cast %76 : vector<1x16xf32> to vector<16xf32>
    %78 = vector.shape_cast %77 : vector<16xf32> to vector<1x16xf32>
    %79 = vector.broadcast %78 : vector<1x16xf32> to vector<32x16xf32>
    %80 = arith.addf %75, %79 : vector<32x16xf32>
    %c0_32 = arith.constant 0 : index
    %c1_33 = arith.constant 1 : index
    %c0_34 = arith.constant 0 : index
    %c0_35 = arith.constant 0 : index
    %81 = vector.load %arg6[%c0_32, %c1_33, %c0_34, %c0_35] : memref<2x2x32x16xf32, #tpu.memory_space<vmem>>, vector<1x1x32x16xf32>
    %82 = vector.shape_cast %81 : vector<1x1x32x16xf32> to vector<32x16xf32>
    %cst_36 = arith.constant dense<0.000000e+00> : vector<32x16xf32>
    %83 = tpu.matmul %72, %82, %cst_36 {dimension_numbers = #tpu.dot_dimension_numbers<[1], [0], [0], [1], [0, 0, 1, 1], [], []>} : vector<32x32xf32>, vector<32x16xf32>, vector<32x16xf32> -> vector<32x16xf32>
    %c0_37 = arith.constant 0 : index
    %c16 = arith.constant 16 : index
    %84 = vector.load %arg7[%c0_37, %c16] : memref<2x32xf32, #tpu.memory_space<vmem>>, vector<1x16xf32>
    %85 = vector.shape_cast %84 : vector<1x16xf32> to vector<16xf32>
    %86 = vector.shape_cast %85 : vector<16xf32> to vector<1x16xf32>
    %87 = vector.broadcast %86 : vector<1x16xf32> to vector<32x16xf32>
    %88 = arith.addf %83, %87 : vector<32x16xf32>
    %cst_38 = arith.constant -5.000000e+00 : f32
    %cst_39 = arith.constant 5.000000e+00 : f32
    %89 = vector.broadcast %cst_38 : f32 to vector<32x16xf32>
    %90 = arith.maximumf %89, %80 : vector<32x16xf32>
    %91 = vector.broadcast %cst_39 : f32 to vector<32x16xf32>
    %92 = arith.minimumf %91, %90 : vector<32x16xf32>
    %93 = math.exp %92 : vector<32x16xf32>
    %94 = arith.mulf %1, %93 : vector<32x16xf32>
    %95 = arith.addf %94, %88 : vector<32x16xf32>
    %c1_40 = arith.constant 1 : index
    %c0_41 = arith.constant 0 : index
    %c0_42 = arith.constant 0 : index
    %96 = vector.load %arg2[%c1_40, %c0_41, %c0_42] : memref<2x16x64xf32, #tpu.memory_space<vmem>>, vector<1x16x64xf32>
    %97 = vector.shape_cast %96 : vector<1x16x64xf32> to vector<16x64xf32>
    %cst_43 = arith.constant dense<0.000000e+00> : vector<32x64xf32>
    %98 = tpu.matmul %95, %97, %cst_43 {dimension_numbers = #tpu.dot_dimension_numbers<[1], [0], [0], [1], [0, 0, 1, 1], [], []>} : vector<32x16xf32>, vector<16x64xf32>, vector<32x64xf32> -> vector<32x64xf32>
    %c1_44 = arith.constant 1 : index
    %c0_45 = arith.constant 0 : index
    %99 = vector.load %arg3[%c1_44, %c0_45] : memref<2x64xf32, #tpu.memory_space<vmem>>, vector<1x64xf32>
    %100 = vector.shape_cast %99 : vector<1x64xf32> to vector<64xf32>
    %101 = vector.shape_cast %100 : vector<64xf32> to vector<1x64xf32>
    %102 = vector.broadcast %101 : vector<1x64xf32> to vector<32x64xf32>
    %103 = arith.addf %98, %102 : vector<32x64xf32>
    %104 = vector.extract_strided_slice %103 {offsets = [0, 0], sizes = [32, 32], strides = [1, 1]} : vector<32x64xf32> to vector<32x32xf32>
    %c2 = arith.constant 2 : index
    %c0_46 = arith.constant 0 : index
    %105 = vector.load %arg4[%c2, %c0_46] : memref<4x32xf32, #tpu.memory_space<vmem>>, vector<1x32xf32>
    %106 = vector.shape_cast %105 : vector<1x32xf32> to vector<32xf32>
    %c2_47 = arith.constant 2 : index
    %c0_48 = arith.constant 0 : index
    %107 = vector.load %arg5[%c2_47, %c0_48] : memref<4x32xf32, #tpu.memory_space<vmem>>, vector<1x32xf32>
    %108 = vector.shape_cast %107 : vector<1x32xf32> to vector<32xf32>
    %cst_49 = arith.constant dense<0.000000e+00> : vector<32xf32>
    %109 = vector.multi_reduction <add>, %104, %cst_49 [1] : vector<32x32xf32> to vector<32xf32>
    %110 = vector.shape_cast %109 : vector<32xf32> to vector<32x1xf32>
    %cst_50 = arith.constant 3.200000e+01 : f32
    %111 = vector.broadcast %cst_50 : f32 to vector<32x1xf32>
    %112 = arith.divf %110, %111 : vector<32x1xf32>
    %113 = vector.broadcast %112 : vector<32x1xf32> to vector<32x32xf32>
    %114 = arith.subf %104, %113 : vector<32x32xf32>
    %115 = arith.mulf %114, %114 : vector<32x32xf32>
    %cst_51 = arith.constant dense<0.000000e+00> : vector<32xf32>
    %116 = vector.multi_reduction <add>, %115, %cst_51 [1] : vector<32x32xf32> to vector<32xf32>
    %117 = vector.shape_cast %116 : vector<32xf32> to vector<32x1xf32>
    %cst_52 = arith.constant 3.200000e+01 : f32
    %118 = vector.broadcast %cst_52 : f32 to vector<32x1xf32>
    %119 = arith.divf %117, %118 : vector<32x1xf32>
    %120 = vector.broadcast %112 : vector<32x1xf32> to vector<32x32xf32>
    %121 = arith.subf %104, %120 : vector<32x32xf32>
    %cst_53 = arith.constant 9.99999974E-6 : f32
    %122 = vector.broadcast %cst_53 : f32 to vector<32x1xf32>
    %123 = arith.addf %119, %122 : vector<32x1xf32>
    %124 = math.rsqrt %123 : vector<32x1xf32>
    %125 = vector.broadcast %124 : vector<32x1xf32> to vector<32x32xf32>
    %126 = arith.mulf %121, %125 : vector<32x32xf32>
    %127 = vector.shape_cast %106 : vector<32xf32> to vector<1x32xf32>
    %128 = vector.broadcast %127 : vector<1x32xf32> to vector<32x32xf32>
    %129 = arith.mulf %126, %128 : vector<32x32xf32>
    %130 = vector.shape_cast %108 : vector<32xf32> to vector<1x32xf32>
    %131 = vector.broadcast %130 : vector<1x32xf32> to vector<32x32xf32>
    %132 = arith.addf %129, %131 : vector<32x32xf32>
    %cst_54 = arith.constant 0.000000e+00 : f32
    %133 = vector.broadcast %cst_54 : f32 to vector<32x32xf32>
    %134 = arith.maximumf %132, %133 : vector<32x32xf32>
    %135 = vector.extract_strided_slice %103 {offsets = [0, 32], sizes = [32, 32], strides = [1, 1]} : vector<32x64xf32> to vector<32x32xf32>
    %c3 = arith.constant 3 : index
    %c0_55 = arith.constant 0 : index
    %136 = vector.load %arg4[%c3, %c0_55] : memref<4x32xf32, #tpu.memory_space<vmem>>, vector<1x32xf32>
    %137 = vector.shape_cast %136 : vector<1x32xf32> to vector<32xf32>
    %c3_56 = arith.constant 3 : index
    %c0_57 = arith.constant 0 : index
    %138 = vector.load %arg5[%c3_56, %c0_57] : memref<4x32xf32, #tpu.memory_space<vmem>>, vector<1x32xf32>
    %139 = vector.shape_cast %138 : vector<1x32xf32> to vector<32xf32>
    %cst_58 = arith.constant dense<0.000000e+00> : vector<32xf32>
    %140 = vector.multi_reduction <add>, %135, %cst_58 [1] : vector<32x32xf32> to vector<32xf32>
    %141 = vector.shape_cast %140 : vector<32xf32> to vector<32x1xf32>
    %cst_59 = arith.constant 3.200000e+01 : f32
    %142 = vector.broadcast %cst_59 : f32 to vector<32x1xf32>
    %143 = arith.divf %141, %142 : vector<32x1xf32>
    %144 = vector.broadcast %143 : vector<32x1xf32> to vector<32x32xf32>
    %145 = arith.subf %135, %144 : vector<32x32xf32>
    %146 = arith.mulf %145, %145 : vector<32x32xf32>
    %cst_60 = arith.constant dense<0.000000e+00> : vector<32xf32>
    %147 = vector.multi_reduction <add>, %146, %cst_60 [1] : vector<32x32xf32> to vector<32xf32>
    %148 = vector.shape_cast %147 : vector<32xf32> to vector<32x1xf32>
    %cst_61 = arith.constant 3.200000e+01 : f32
    %149 = vector.broadcast %cst_61 : f32 to vector<32x1xf32>
    %150 = arith.divf %148, %149 : vector<32x1xf32>
    %151 = vector.broadcast %143 : vector<32x1xf32> to vector<32x32xf32>
    %152 = arith.subf %135, %151 : vector<32x32xf32>
    %cst_62 = arith.constant 9.99999974E-6 : f32
    %153 = vector.broadcast %cst_62 : f32 to vector<32x1xf32>
    %154 = arith.addf %150, %153 : vector<32x1xf32>
    %155 = math.rsqrt %154 : vector<32x1xf32>
    %156 = vector.broadcast %155 : vector<32x1xf32> to vector<32x32xf32>
    %157 = arith.mulf %152, %156 : vector<32x32xf32>
    %158 = vector.shape_cast %137 : vector<32xf32> to vector<1x32xf32>
    %159 = vector.broadcast %158 : vector<1x32xf32> to vector<32x32xf32>
    %160 = arith.mulf %157, %159 : vector<32x32xf32>
    %161 = vector.shape_cast %139 : vector<32xf32> to vector<1x32xf32>
    %162 = vector.broadcast %161 : vector<1x32xf32> to vector<32x32xf32>
    %163 = arith.addf %160, %162 : vector<32x32xf32>
    %cst_63 = arith.constant 0.000000e+00 : f32
    %164 = vector.broadcast %cst_63 : f32 to vector<32x32xf32>
    %165 = arith.maximumf %163, %164 : vector<32x32xf32>
    %c1_64 = arith.constant 1 : index
    %c0_65 = arith.constant 0 : index
    %c0_66 = arith.constant 0 : index
    %c0_67 = arith.constant 0 : index
    %166 = vector.load %arg6[%c1_64, %c0_65, %c0_66, %c0_67] : memref<2x2x32x16xf32, #tpu.memory_space<vmem>>, vector<1x1x32x16xf32>
    %167 = vector.shape_cast %166 : vector<1x1x32x16xf32> to vector<32x16xf32>
    %cst_68 = arith.constant dense<0.000000e+00> : vector<32x16xf32>
    %168 = tpu.matmul %134, %167, %cst_68 {dimension_numbers = #tpu.dot_dimension_numbers<[1], [0], [0], [1], [0, 0, 1, 1], [], []>} : vector<32x32xf32>, vector<32x16xf32>, vector<32x16xf32> -> vector<32x16xf32>
    %c1_69 = arith.constant 1 : index
    %c0_70 = arith.constant 0 : index
    %169 = vector.load %arg7[%c1_69, %c0_70] : memref<2x32xf32, #tpu.memory_space<vmem>>, vector<1x16xf32>
    %170 = vector.shape_cast %169 : vector<1x16xf32> to vector<16xf32>
    %171 = vector.shape_cast %170 : vector<16xf32> to vector<1x16xf32>
    %172 = vector.broadcast %171 : vector<1x16xf32> to vector<32x16xf32>
    %173 = arith.addf %168, %172 : vector<32x16xf32>
    %c1_71 = arith.constant 1 : index
    %c1_72 = arith.constant 1 : index
    %c0_73 = arith.constant 0 : index
    %c0_74 = arith.constant 0 : index
    %174 = vector.load %arg6[%c1_71, %c1_72, %c0_73, %c0_74] : memref<2x2x32x16xf32, #tpu.memory_space<vmem>>, vector<1x1x32x16xf32>
    %175 = vector.shape_cast %174 : vector<1x1x32x16xf32> to vector<32x16xf32>
    %cst_75 = arith.constant dense<0.000000e+00> : vector<32x16xf32>
    %176 = tpu.matmul %165, %175, %cst_75 {dimension_numbers = #tpu.dot_dimension_numbers<[1], [0], [0], [1], [0, 0, 1, 1], [], []>} : vector<32x32xf32>, vector<32x16xf32>, vector<32x16xf32> -> vector<32x16xf32>
    %c1_76 = arith.constant 1 : index
    %c16_77 = arith.constant 16 : index
    %177 = vector.load %arg7[%c1_76, %c16_77] : memref<2x32xf32, #tpu.memory_space<vmem>>, vector<1x16xf32>
    %178 = vector.shape_cast %177 : vector<1x16xf32> to vector<16xf32>
    %179 = vector.shape_cast %178 : vector<16xf32> to vector<1x16xf32>
    %180 = vector.broadcast %179 : vector<1x16xf32> to vector<32x16xf32>
    %181 = arith.addf %176, %180 : vector<32x16xf32>
    %cst_78 = arith.constant -5.000000e+00 : f32
    %cst_79 = arith.constant 5.000000e+00 : f32
    %182 = vector.broadcast %cst_78 : f32 to vector<32x16xf32>
    %183 = arith.maximumf %182, %173 : vector<32x16xf32>
    %184 = vector.broadcast %cst_79 : f32 to vector<32x16xf32>
    %185 = arith.minimumf %184, %183 : vector<32x16xf32>
    %186 = math.exp %185 : vector<32x16xf32>
    %187 = arith.mulf %2, %186 : vector<32x16xf32>
    %188 = arith.addf %187, %181 : vector<32x16xf32>
    %c0_80 = arith.constant 0 : index
    %c0_81 = arith.constant 0 : index
    %189 = vector.load %arg8[%c0_80, %c0_81] : memref<32x32xf32, #tpu.memory_space<vmem>>, vector<32x16xf32>
    tpu.vector_store %arg8[%c0_80, %c0_81], %95 {strides = array<i32>} : memref<32x32xf32, #tpu.memory_space<vmem>>, vector<32x16xf32>,
    %c0_82 = arith.constant 0 : index
    %c16_83 = arith.constant 16 : index
    %190 = vector.load %arg8[%c0_82, %c16_83] : memref<32x32xf32, #tpu.memory_space<vmem>>, vector<32x16xf32>
    tpu.vector_store %arg8[%c0_82, %c16_83], %188 {strides = array<i32>} : memref<32x32xf32, #tpu.memory_space<vmem>>, vector<32x16xf32>,
    return
  }
  func.func @transform_0(%arg0: i32) -> (i32, i32) {
    %c0_i32 = arith.constant 0 : i32
    %c0_i32_0 = arith.constant 0 : i32
    return %arg0, %c0_i32 : i32, i32
  }
  func.func @transform_1(%arg0: i32) -> (i32, i32, i32) {
    %c0_i32 = arith.constant 0 : i32
    %c0_i32_0 = arith.constant 0 : i32
    %c0_i32_1 = arith.constant 0 : i32
    %c0_i32_2 = arith.constant 0 : i32
    return %c0_i32, %c0_i32_0, %c0_i32_1 : i32, i32, i32
  }
  func.func @transform_2(%arg0: i32) -> (i32, i32) {
    %c0_i32 = arith.constant 0 : i32
    %c0_i32_0 = arith.constant 0 : i32
    %c0_i32_1 = arith.constant 0 : i32
    return %c0_i32, %c0_i32_0 : i32, i32
  }
  func.func @transform_3(%arg0: i32) -> (i32, i32) {
    %c0_i32 = arith.constant 0 : i32
    %c0_i32_0 = arith.constant 0 : i32
    %c0_i32_1 = arith.constant 0 : i32
    return %c0_i32, %c0_i32_0 : i32, i32
  }
  func.func @transform_4(%arg0: i32) -> (i32, i32) {
    %c0_i32 = arith.constant 0 : i32
    %c0_i32_0 = arith.constant 0 : i32
    %c0_i32_1 = arith.constant 0 : i32
    return %c0_i32, %c0_i32_0 : i32, i32
  }
  func.func @transform_5(%arg0: i32) -> (i32, i32, i32, i32) {
    %c0_i32 = arith.constant 0 : i32
    %c0_i32_0 = arith.constant 0 : i32
    %c0_i32_1 = arith.constant 0 : i32
    %c0_i32_2 = arith.constant 0 : i32
    %c0_i32_3 = arith.constant 0 : i32
    return %c0_i32, %c0_i32_0, %c0_i32_1, %c0_i32_2 : i32, i32, i32, i32
  }
  func.func @transform_6(%arg0: i32) -> (i32, i32) {
    %c0_i32 = arith.constant 0 : i32
    %c0_i32_0 = arith.constant 0 : i32
    %c0_i32_1 = arith.constant 0 : i32
    return %c0_i32, %c0_i32_0 : i32, i32
  }
  func.func @transform_7(%arg0: i32) -> (i32, i32) {
    %c0_i32 = arith.constant 0 : i32
    %c0_i32_0 = arith.constant 0 : i32
    return %arg0, %c0_i32 : i32, i32
  }
}

</mosaic_0001>

<llo_original>
// kernel: _interaction_call.1
$region0: #{_interaction_call.1}
  #allocation0 [shape = 'u32[]', space=smem, size = 0x4, offset = 0x4, fixed_abs, tag = 'smem constant byte address 0x4 - core index']
  #allocation1 [shape = 'u32[72,128]{1,0:T(1,128)}', space=vmem, size = 0x9000, scoped, tag = 'internal scratch']
  %s0 = inlined_call_operand.vmem [shape: f32[128,32], index: 0, kind: input, shape index: {}]
  %s1 = inlined_call_operand.vmem [shape: f32[2,16,64], index: 1, kind: input, shape index: {}]
  %s2 = inlined_call_operand.vmem [shape: f32[2,64], index: 2, kind: input, shape index: {}]
  %s3 = inlined_call_operand.vmem [shape: f32[4,32], index: 3, kind: input, shape index: {}]
  %s4 = inlined_call_operand.vmem [shape: f32[4,32], index: 4, kind: input, shape index: {}]
  %s5 = inlined_call_operand.vmem [shape: f32[2,2,32,16], index: 5, kind: input, shape index: {}]
  %s6 = inlined_call_operand.vmem [shape: f32[2,32], index: 6, kind: input, shape index: {}]
  %s7 = inlined_call_operand.vmem [shape: f32[128,32], index: 7, kind: output, shape index: {}]
  %s8 = sld [smem:[#allocation0]]
  $region61: #{_interaction_call.1} parent=0
    _
  %s10 = ssub.s32 1, %s8
  %s11 = scalar_select 0, %s10, %s8
  loop: start=0, step=1, limit=6
  $region2: #{_interaction_call.1} parent=0 // loop_pre_header
    _
  $region3: #{_interaction_call.1} parent=0 // loop_header
    %s13 = sphi 0, %s17
    %p14 = scmp.ge.s32.totalorder %s13, 6
    %s23 = sphi 0, %s25
    %s26 = sphi 0, %s23
    %s27 = sphi 0, %s26
    %s43 = sphi 0, %s27
    %s47 = sphi 0, %s47
    %s49 = sphi 0, %s47
    %s50 = sphi 0, %s49
    %s64 = sphi 0, %s50
    %s68 = sphi 0, %s68
    %s70 = sphi 0, %s68
    %s71 = sphi 0, %s70
    %s85 = sphi 0, %s71
    %s89 = sphi 0, %s89
    %s91 = sphi 0, %s89
    %s92 = sphi 0, %s91
    %s106 = sphi 0, %s92
    %s110 = sphi 0, %s110
    %s112 = sphi 0, %s110
    %s113 = sphi 0, %s112
    %s127 = sphi 0, %s113
    %s131 = sphi 0, %s131
    %s133 = sphi 0, %s131
    %s134 = sphi 0, %s133
    %s148 = sphi 0, %s134
    %s152 = sphi 0, %s152
    %s154 = sphi 0, %s152
    %s155 = sphi 0, %s154
    %s169 = sphi 0, %s155
    %s175 = sphi 0, %s177
    %s178 = sphi 0, %s175
    %s179 = sphi 0, %s178
    %s195 = sphi 0, %s179
  $region4: #{_interaction_call.1} parent=0 // loop_header_branch
    %16 = sbr.rel (%p14) target = $region8
  $region5: #{_interaction_call.1} parent=0 // loop_body
    %s18 = ssub.s32 %s13, 1
    %s19 = ssub.s32 %s13, 2
    %s20 = sadd.s32 %s13, 1
    %s21 = ssub.s32 %s13, %s20
    %p22 = scmp.eq.s32.totalorder %s21, 0
    %s24 = sadd.s32 %s23, 1
    %s25 = scalar_select %p22, %s23, %s24
    %p28 = pneg %p22
    %p29 = scmp.eq.s32.totalorder %s13, 3
    %p30 = por %p28, %p29
    %p31 = scmp.ne.s32.totalorder %s23, %s26
    %p32 = scmp.eq.s32.totalorder %s13, 0
    %p33 = por %p31, %p32
    %p34 = scmp.ne.s32.totalorder %s23, %s26
    %p35 = scmp.eq.s32.totalorder %s18, 3
    %p36 = por %p34, %p35
    %p37 = scmp.ne.s32.totalorder %s26, %s27
    %p38 = scmp.eq.s32.totalorder %s18, 0
    %p39 = por %p37, %p38
    %p40 = scmp.ne.s32.totalorder %s26, %s27
    %p41 = scmp.eq.s32.totalorder %s19, 3
    %p42 = por %p40, %p41
    %p44 = scmp.ne.s32.totalorder %s27, %s43
    %p45 = scmp.eq.s32.totalorder %s19, 0
    %p46 = por %p44, %p45
    %s48 = sadd.s32 %s47, 1
    %p51 = scmp.eq.s32.totalorder %s13, 3
    %p52 = scmp.ne.s32.totalorder %s47, %s49
    %p53 = scmp.eq.s32.totalorder %s13, 0
    %p54 = por %p52, %p53
    %p55 = scmp.ne.s32.totalorder %s47, %s49
    %p56 = scmp.eq.s32.totalorder %s18, 3
    %p57 = por %p55, %p56
    %p58 = scmp.ne.s32.totalorder %s49, %s50
    %p59 = scmp.eq.s32.totalorder %s18, 0
    %p60 = por %p58, %p59
    %p61 = scmp.ne.s32.totalorder %s49, %s50
    %p62 = scmp.eq.s32.totalorder %s19, 3
    %p63 = por %p61, %p62
    %p65 = scmp.ne.s32.totalorder %s50, %s64
    %p66 = scmp.eq.s32.totalorder %s19, 0
    %p67 = por %p65, %p66
    %s69 = sadd.s32 %s68, 1
    %p72 = scmp.eq.s32.totalorder %s13, 3
    %p73 = scmp.ne.s32.totalorder %s68, %s70
    %p74 = scmp.eq.s32.totalorder %s13, 0
    %p75 = por %p73, %p74
    %p76 = scmp.ne.s32.totalorder %s68, %s70
    %p77 = scmp.eq.s32.totalorder %s18, 3
    %p78 = por %p76, %p77
    %p79 = scmp.ne.s32.totalorder %s70, %s71
    %p80 = scmp.eq.s32.totalorder %s18, 0
    %p81 = por %p79, %p80
    %p82 = scmp.ne.s32.totalorder %s70, %s71
    %p83 = scmp.eq.s32.totalorder %s19, 3
    %p84 = por %p82, %p83
    %p86 = scmp.ne.s32.totalorder %s71, %s85
    %p87 = scmp.eq.s32.totalorder %s19, 0
    %p88 = por %p86, %p87
    %s90 = sadd.s32 %s89, 1
    %p93 = scmp.eq.s32.totalorder %s13, 3
    %p94 = scmp.ne.s32.totalorder %s89, %s91
    %p95 = scmp.eq.s32.totalorder %s13, 0
    %p96 = por %p94, %p95
    %p97 = scmp.ne.s32.totalorder %s89, %s91
    %p98 = scmp.eq.s32.totalorder %s18, 3
    %p99 = por %p97, %p98
    %p100 = scmp.ne.s32.totalorder %s91, %s92
    %p101 = scmp.eq.s32.totalorder %s18, 0
    %p102 = por %p100, %p101
    %p103 = scmp.ne.s32.totalorder %s91, %s92
    %p104 = scmp.eq.s32.totalorder %s19, 3
    %p105 = por %p103, %p104
    %p107 = scmp.ne.s32.totalorder %s92, %s106
    %p108 = scmp.eq.s32.totalorder %s19, 0
    %p109 = por %p107, %p108
    %s111 = sadd.s32 %s110, 1
    %p114 = scmp.eq.s32.totalorder %s13, 3
    %p115 = scmp.ne.s32.totalorder %s110, %s112
    %p116 = scmp.eq.s32.totalorder %s13, 0
    %p117 = por %p115, %p116
    %p118 = scmp.ne.s32.totalorder %s110, %s112
    %p119 = scmp.eq.s32.totalorder %s18, 3
    %p120 = por %p118, %p119
    %p121 = scmp.ne.s32.totalorder %s112, %s113
    %p122 = scmp.eq.s32.totalorder %s18, 0
    %p123 = por %p121, %p122
    %p124 = scmp.ne.s32.totalorder %s112, %s113
    %p125 = scmp.eq.s32.totalorder %s19, 3
    %p126 = por %p124, %p125
    %p128 = scmp.ne.s32.totalorder %s113, %s127
    %p129 = scmp.eq.s32.totalorder %s19, 0
    %p130 = por %p128, %p129
    %s132 = sadd.s32 %s131, 1
    %p135 = scmp.eq.s32.totalorder %s13, 3
    %p136 = scmp.ne.s32.totalorder %s131, %s133
    %p137 = scmp.eq.s32.totalorder %s13, 0
    %p138 = por %p136, %p137
    %p139 = scmp.ne.s32.totalorder %s131, %s133
    %p140 = scmp.eq.s32.totalorder %s18, 3
    %p141 = por %p139, %p140
    %p142 = scmp.ne.s32.totalorder %s133, %s134
    %p143 = scmp.eq.s32.totalorder %s18, 0
    %p144 = por %p142, %p143
    %p145 = scmp.ne.s32.totalorder %s133, %s134
    %p146 = scmp.eq.s32.totalorder %s19, 3
    %p147 = por %p145, %p146
    %p149 = scmp.ne.s32.totalorder %s134, %s148
    %p150 = scmp.eq.s32.totalorder %s19, 0
    %p151 = por %p149, %p150
    %s153 = sadd.s32 %s152, 1
    %p156 = scmp.eq.s32.totalorder %s13, 3
    %p157 = scmp.ne.s32.totalorder %s152, %s154
    %p158 = scmp.eq.s32.totalorder %s13, 0
    %p159 = por %p157, %p158
    %p160 = scmp.ne.s32.totalorder %s152, %s154
    %p161 = scmp.eq.s32.totalorder %s18, 3
    %p162 = por %p160, %p161
    %p163 = scmp.ne.s32.totalorder %s154, %s155
    %p164 = scmp.eq.s32.totalorder %s18, 0
    %p165 = por %p163, %p164
    %p166 = scmp.ne.s32.totalorder %s154, %s155
    %p167 = scmp.eq.s32.totalorder %s19, 3
    %p168 = por %p166, %p167
    %p170 = scmp.ne.s32.totalorder %s155, %s169
    %p171 = scmp.eq.s32.totalorder %s19, 0
    %p172 = por %p170, %p171
    %s173 = ssub.s32 %s13, %s20
    %p174 = scmp.eq.s32.totalorder %s173, 0
    %s176 = sadd.s32 %s175, 1
    %s177 = scalar_select %p174, %s175, %s176
    %p180 = pneg %p174
    %p181 = scmp.eq.s32.totalorder %s13, 3
    %p182 = por %p180, %p181
    %p183 = scmp.ne.s32.totalorder %s175, %s178
    %p184 = scmp.eq.s32.totalorder %s13, 0
    %p185 = por %p183, %p184
    %p186 = scmp.ne.s32.totalorder %s175, %s178
    %p187 = scmp.eq.s32.totalorder %s18, 3
    %p188 = por %p186, %p187
    %p189 = scmp.ne.s32.totalorder %s178, %s179
    %p190 = scmp.eq.s32.totalorder %s18, 0
    %p191 = por %p189, %p190
    %p192 = scmp.ne.s32.totalorder %s178, %s179
    %p193 = scmp.eq.s32.totalorder %s19, 3
    %p194 = por %p192, %p193
    %p196 = scmp.ne.s32.totalorder %s179, %s195
    %p197 = scmp.eq.s32.totalorder %s19, 0
    %p198 = por %p196, %p197
    %p199 = scmp.le.s32.totalorder 1, %s13
    %p200 = scmp.lt.s32.totalorder %s13, 5
    %p201 = pnand %p199, %p200
    %p202 = pneg %p201
    // Predicated region
    $region9: #{_interaction_call.1} parent=5 // pred_check
      _
    $region10: #{_interaction_call.1} parent=5 // pred_check_branch
      %204 = sbr.rel (%p201) target = $region12
    $region11: #{_interaction_call.1} parent=5 // pred_region
      %s205 = ssub.s32 %s13, 1
      // Predicated region
      $region13: #{_interaction_call.1} parent=11 // pred_check
        %p206 = pneg %p60
      $region14: #{_interaction_call.1} parent=11 // pred_check_branch
        %208 = sbr.rel (%p206) target = $region16
      $region15: #{_interaction_call.1} parent=11 // pred_region
        _
      $region16: #{_interaction_call.1} parent=11 // pred_fallthru
        _
      // Predicated region
      $region17: #{_interaction_call.1} parent=11 // pred_check
        %p209 = pneg %p81
      $region18: #{_interaction_call.1} parent=11 // pred_check_branch
        %211 = sbr.rel (%p209) target = $region20
      $region19: #{_interaction_call.1} parent=11 // pred_region
        _
      $region20: #{_interaction_call.1} parent=11 // pred_fallthru
        _
      // Predicated region
      $region21: #{_interaction_call.1} parent=11 // pred_check
        %p212 = pneg %p102
      $region22: #{_interaction_call.1} parent=11 // pred_check_branch
        %214 = sbr.rel (%p212) target = $region24
      $region23: #{_interaction_call.1} parent=11 // pred_region
        _
      $region24: #{_interaction_call.1} parent=11 // pred_fallthru
        _
      // Predicated region
      $region25: #{_interaction_call.1} parent=11 // pred_check
        %p215 = pneg %p123
      $region26: #{_interaction_call.1} parent=11 // pred_check_branch
        %217 = sbr.rel (%p215) target = $region28
      $region27: #{_interaction_call.1} parent=11 // pred_region
        _
      $region28: #{_interaction_call.1} parent=11 // pred_fallthru
        _
      // Predicated region
      $region29: #{_interaction_call.1} parent=11 // pred_check
        %p218 = pneg %p144
      $region30: #{_interaction_call.1} parent=11 // pred_check_branch
        %220 = sbr.rel (%p218) target = $region32
      $region31: #{_interaction_call.1} parent=11 // pred_region
        _
      $region32: #{_interaction_call.1} parent=11 // pred_fallthru
        _
      // Predicated region
      $region33: #{_interaction_call.1} parent=11 // pred_check
        %p221 = pneg %p165
      $region34: #{_interaction_call.1} parent=11 // pred_check_branch
        %223 = sbr.rel (%p221) target = $region36
      $region35: #{_interaction_call.1} parent=11 // pred_region
        _
      $region36: #{_interaction_call.1} parent=11 // pred_fallthru
        _
    $region12: #{_interaction_call.1} parent=5 // pred_fallthru
      _
    %p224 = scmp.lt.s32.totalorder %s13, 4
    // Predicated region
    $region37: #{_interaction_call.1} parent=5 // pred_check
      %p225 = pneg %p224
    $region38: #{_interaction_call.1} parent=5 // pred_check_branch
      %227 = sbr.rel (%p225) target = $region40
    $region39: #{_interaction_call.1} parent=5 // pred_region
      // Predicated region
      $region41: #{_interaction_call.1} parent=39 // pred_check
        %p228 = pneg %p33
      $region42: #{_interaction_call.1} parent=39 // pred_check_branch
        %230 = sbr.rel (%p228) target = $region44
      $region43: #{_interaction_call.1} parent=39 // pred_region
        %s231 = smul.u32 4, %s13
        %p232 = scmp.lt.s32.totalorder %s231, 15
        %s233 = scalar_select %p232, %s231, 15
        %s234 = smul.addr %s233, 8
        %s235 = scalar_lea.vmem %s0, %s234
        %s236 = smul.u32 4, %s13
      $region44: #{_interaction_call.1} parent=39 // pred_fallthru
        _
    $region40: #{_interaction_call.1} parent=5 // pred_fallthru
      _
    %p237 = scmp.le.s32.totalorder 1, %s13
    %p238 = scmp.lt.s32.totalorder %s13, 5
    %p239 = pnand %p237, %p238
    %p240 = pneg %p239
    // Predicated region
    $region45: #{_interaction_call.1} parent=5 // pred_check
      _
    $region46: #{_interaction_call.1} parent=5 // pred_check_branch
      %242 = sbr.rel (%p239) target = $region48
    $region47: #{_interaction_call.1} parent=5 // pred_region
      %s243 = ssub.s32 %s13, 1
      %s244 = smul.u32 4, %s18
      %p245 = scmp.lt.s32.totalorder %s244, 15
      %s246 = scalar_select %p245, %s244, 15
      %s247 = smul.addr %s246, 8
      %s248 = scalar_lea.vmem %s0, %s247
      %p249 = pneg %p39
      %p250 = pneg %p36
      %p251 = pneg %p60
      %p252 = pneg %p57
      %p253 = pneg %p81
      %p254 = pneg %p78
      %p255 = pneg %p102
      %p256 = pneg %p99
      %p257 = pneg %p123
      %p258 = pneg %p120
      %p259 = pneg %p144
      %p260 = pneg %p141
      %p261 = pneg %p165
      %p262 = pneg %p162
      %p263 = pneg %p191
      %p264 = pneg %p188
      %s265 = smul.u32 4, %s18
      %p266 = scmp.lt.s32.totalorder %s265, 15
      %s267 = scalar_select %p266, %s265, 15
      %s268 = smul.addr %s267, 8
      %s269 = scalar_lea.vmem %s7, %s268
      %s270 = smul.u32 4, %s18
      %p271 = scmp.lt.s32.totalorder %s270, 15
      %s272 = scalar_select %p271, %s270, 15
      %s273 = smul.addr %s272, 8
      %s274 = scalar_lea.vmem %s0, %s273
      %s275 = smul.u32 4, %s18
      %s276 = smul.u32 4, %s18
      %p277 = scmp.lt.s32.totalorder %s276, 15
      %s278 = scalar_select %p277, %s276, 15
      %s279 = smul.addr %s278, 8
      %s280 = scalar_lea.vmem %s7, %s279
      %s281 = smul.u32 4, %s18
      %v282 = vld [vmem:[%s274] sm:$0xff]
      %v283 = vld [vmem:[%s274 + $0x8] sm:$0xff]
      %v284 = vld [vmem:[%s274 + $0x10] sm:$0xff]
      %v285 = vld [vmem:[%s274 + $0x18] sm:$0xff]
      %v286 = vld [vmem:[%s1] sm:$0xff]
      %v287 = vld [vmem:[%s1 + $0x8] sm:$0xff]
      %v288 = vld [vmem:[%s2] sm:$0x1]
      %v289 = vperm.slane %v288, 0
      %294 = vrot.lane.b32.xlu0 %v282, 112
      %v295 = vpop.permute.xlu0 %294
      %296 = vrot.lane.b32.xlu0 %v283, 112
      %v297 = vpop.permute.xlu0 %296
      %298 = vrot.lane.b32.xlu0 %v284, 112
      %v299 = vpop.permute.xlu0 %298
      %300 = vrot.lane.b32.xlu0 %v285, 112
      %v301 = vpop.permute.xlu0 %300
      %vm302 = vcmask 130048
      %v303 = vsel %vm302, %v295, 0
      %v305 = vsel %vm302, %v297, 0
      %v307 = vsel %vm302, %v299, 0
      %v309 = vsel %vm302, %v301, 0
      %311 = vmatpush.msra.mxu0 0.0
      %312 = vmatpush.msra.mxu0 0.0
      %313 = vmatpush.msra.mxu0 0.0
      %314 = vmatpush.msra.mxu0 0.0
      %315 = vmatpush.msra.mxu0 0.0
      %316 = vmatpush.msra.mxu0 0.0
      %317 = vmatpush.msra.mxu0 0.0
      %318 = vmatpush.msra.mxu0 0.0
      %319 = vmatpush.msra.mxu0 0.0
      %320 = vmatpush.msra.mxu0 0.0
      %321 = vmatpush.msra.mxu0 0.0
      %322 = vmatpush.msra.mxu0 0.0
      %323 = vmatpush.msra.mxu0 0.0
      %324 = vmatpush.msra.mxu0 0.0
      %325 = vmatpush.msra.mxu0 %v287
      %326 = vmatpush.msra.mxu0 %v286
      %327 = vmatmul.f32.gmra.mxu0 %v303
      %v328 = vpop.f32.mrf.mxu0
      %v329 = vadd.f32 %v289, %v328
      %330 = vmatmul.f32.gmra.mxu0 %v305
      %v331 = vpop.f32.mrf.mxu0
      %v332 = vadd.f32 %v289, %v331
      %333 = vmatmul.f32.gmra.mxu0 %v307
      %v334 = vpop.f32.mrf.mxu0
      %v335 = vadd.f32 %v289, %v334
      %336 = vmatmul.f32.gmra.mxu0 %v309
      %v337 = vpop.f32.mrf.mxu0
      %v338 = vadd.f32 %v289, %v337
      %339 = vdwg.mxu0
      %v340 = vld [vmem:[%s3] sm:$0x1]
      %v341 = vld [vmem:[%s4] sm:$0x1]
      %vm342 = vcmask 261120
      %v343 = vsel %vm342, %v329, 0.0
      %344 = vadd.xlane.f32.xlu0 %v343
      %v345 = vpop.xlane.xlu0 %344
      %v346 = vsel %vm342, %v332, 0.0
      %347 = vadd.xlane.f32.xlu0 %v346
      %v348 = vpop.xlane.xlu0 %347
      %v349 = vsel %vm342, %v335, 0.0
      %350 = vadd.xlane.f32.xlu0 %v349
      %v351 = vpop.xlane.xlu0 %350
      %v352 = vsel %vm342, %v338, 0.0
      %353 = vadd.xlane.f32.xlu0 %v352
      %v354 = vpop.xlane.xlu0 %353
      %v355 = vrcp.pop 32.0
      %v356 = vmul.f32 32.0, %v355
      %v357 = vsub.f32 1.0, %v356
      %v358 = vmul.f32 %v355, %v357
      %v359 = vadd.f32 %v355, %v358
      %vm360 = vweird.f32 %v355
      %v361 = vsel %vm360, %v355, %v359
      %v362 = vmul.f32 %v345, %v361
      %v363 = vmul.f32 %v348, %v361
      %v364 = vmul.f32 %v351, %v361
      %v365 = vmul.f32 %v354, %v361
      %v366 = vsub.f32 %v329, %v362
      %v367 = vsub.f32 %v332, %v363
      %v368 = vsub.f32 %v335, %v364
      %v369 = vsub.f32 %v338, %v365
      %v370 = vmul.f32 %v366, %v366
      %v371 = vmul.f32 %v367, %v367
      %v372 = vmul.f32 %v368, %v368
      %v373 = vmul.f32 %v369, %v369
      %v374 = vsel %vm342, %v370, 0.0
      %375 = vadd.xlane.f32.xlu0 %v374
      %v376 = vpop.xlane.xlu0 %375
      %v377 = vsel %vm342, %v371, 0.0
      %378 = vadd.xlane.f32.xlu0 %v377
      %v379 = vpop.xlane.xlu0 %378
      %v380 = vsel %vm342, %v372, 0.0
      %381 = vadd.xlane.f32.xlu0 %v380
      %v382 = vpop.xlane.xlu0 %381
      %v383 = vsel %vm342, %v373, 0.0
      %384 = vadd.xlane.f32.xlu0 %v383
      %v385 = vpop.xlane.xlu0 %384
      %v386 = vmul.f32 %v376, %v361
      %v387 = vmul.f32 %v379, %v361
      %v388 = vmul.f32 %v382, %v361
      %v389 = vmul.f32 %v385, %v361
      %v390 = vadd.f32 %v386, 1e-05
      %v391 = vadd.f32 %v387, 1e-05
      %v392 = vadd.f32 %v388, 1e-05
      %v393 = vadd.f32 %v389, 1e-05
      %v394 = vrsqrt.pop %v390
      %v395 = vmul.f32 %v394, %v390
      %v396 = vmul.f32 %v395, %v394
      %v397 = vmul.f32 0.5, %v396
      %v398 = vsub.f32 1.5, %v397
      %v399 = vmul.f32 %v394, %v398
      %vm400 = vweird.f32 %v390
      %vm401 = vweird.f32 %v394
      %vm402 = vmor %vm400, %vm401
      %v403 = vsel %vm402, %v394, %v399
      %v404 = vrsqrt.pop %v391
      %v405 = vmul.f32 %v404, %v391
      %v406 = vmul.f32 %v405, %v404
      %v407 = vmul.f32 0.5, %v406
      %v408 = vsub.f32 1.5, %v407
      %v409 = vmul.f32 %v404, %v408
      %vm410 = vweird.f32 %v391
      %vm411 = vweird.f32 %v404
      %vm412 = vmor %vm410, %vm411
      %v413 = vsel %vm412, %v404, %v409
      %v414 = vrsqrt.pop %v392
      %v415 = vmul.f32 %v414, %v392
      %v416 = vmul.f32 %v415, %v414
      %v417 = vmul.f32 0.5, %v416
      %v418 = vsub.f32 1.5, %v417
      %v419 = vmul.f32 %v414, %v418
      %vm420 = vweird.f32 %v392
      %vm421 = vweird.f32 %v414
      %vm422 = vmor %vm420, %vm421
      %v423 = vsel %vm422, %v414, %v419
      %v424 = vrsqrt.pop %v393
      %v425 = vmul.f32 %v424, %v393
      %v426 = vmul.f32 %v425, %v424
      %v427 = vmul.f32 0.5, %v426
      %v428 = vsub.f32 1.5, %v427
      %v429 = vmul.f32 %v424, %v428
      %vm430 = vweird.f32 %v393
      %vm431 = vweird.f32 %v424
      %vm432 = vmor %vm430, %vm431
      %v433 = vsel %vm432, %v424, %v429
      %v434 = vmul.f32 %v366, %v403
      %v435 = vmul.f32 %v367, %v413
      %v436 = vmul.f32 %v368, %v423
      %v437 = vmul.f32 %v369, %v433
      %v438 = vperm.slane %v340, 0
      %v439 = vmul.f32 %v434, %v438
      %v440 = vmul.f32 %v435, %v438
      %v441 = vmul.f32 %v436, %v438
      %v442 = vmul.f32 %v437, %v438
      %v443 = vperm.slane %v341, 0
      %v444 = vadd.f32 %v439, %v443
      %v445 = vadd.f32 %v440, %v443
      %v446 = vadd.f32 %v441, %v443
      %v447 = vadd.f32 %v442, %v443
      %v448 = vmax.f32 %v444, 0.0
      %v449 = vmax.f32 %v445, 0.0
      %v450 = vmax.f32 %v446, 0.0
      %v451 = vmax.f32 %v447, 0.0
      %v452 = vld [vmem:[%s3 + $0x1] sm:$0x1]
      %v453 = vld [vmem:[%s4 + $0x1] sm:$0x1]
      %458 = vrot.lane.b32.xlu0 %v329, 96
      %v459 = vpop.permute.xlu0 %458
      %460 = vrot.lane.b32.xlu0 %v332, 96
      %v461 = vpop.permute.xlu0 %460
      %462 = vrot.lane.b32.xlu0 %v335, 96
      %v463 = vpop.permute.xlu0 %462
      %464 = vrot.lane.b32.xlu0 %v338, 96
      %v465 = vpop.permute.xlu0 %464
      %v470 = vsel %vm342, %v459, 0.0
      %471 = vadd.xlane.f32.xlu0 %v470
      %v472 = vpop.xlane.xlu0 %471
      %v473 = vsel %vm342, %v461, 0.0
      %474 = vadd.xlane.f32.xlu0 %v473
      %v475 = vpop.xlane.xlu0 %474
      %v476 = vsel %vm342, %v463, 0.0
      %477 = vadd.xlane.f32.xlu0 %v476
      %v478 = vpop.xlane.xlu0 %477
      %v479 = vsel %vm342, %v465, 0.0
      %480 = vadd.xlane.f32.xlu0 %v479
      %v481 = vpop.xlane.xlu0 %480
      %v482 = vmul.f32 %v472, %v361
      %v483 = vmul.f32 %v475, %v361
      %v484 = vmul.f32 %v478, %v361
      %v485 = vmul.f32 %v481, %v361
      %v486 = vsub.f32 %v329, %v482
      %v487 = vsub.f32 %v332, %v483
      %v488 = vsub.f32 %v335, %v484
      %v489 = vsub.f32 %v338, %v485
      %v490 = vmul.f32 %v486, %v486
      %v491 = vmul.f32 %v487, %v487
      %v492 = vmul.f32 %v488, %v488
      %v493 = vmul.f32 %v489, %v489
      %498 = vrot.lane.b32.xlu0 %v490, 96
      %v499 = vpop.permute.xlu0 %498
      %500 = vrot.lane.b32.xlu0 %v491, 96
      %v501 = vpop.permute.xlu0 %500
      %502 = vrot.lane.b32.xlu0 %v492, 96
      %v503 = vpop.permute.xlu0 %502
      %504 = vrot.lane.b32.xlu0 %v493, 96
      %v505 = vpop.permute.xlu0 %504
      %v510 = vsel %vm342, %v499, 0.0
      %511 = vadd.xlane.f32.xlu0 %v510
      %v512 = vpop.xlane.xlu0 %511
      %v513 = vsel %vm342, %v501, 0.0
      %514 = vadd.xlane.f32.xlu0 %v513
      %v515 = vpop.xlane.xlu0 %514
      %v516 = vsel %vm342, %v503, 0.0
      %517 = vadd.xlane.f32.xlu0 %v516
      %v518 = vpop.xlane.xlu0 %517
      %v519 = vsel %vm342, %v505, 0.0
      %520 = vadd.xlane.f32.xlu0 %v519
      %v521 = vpop.xlane.xlu0 %520
      %v522 = vmul.f32 %v512, %v361
      %v523 = vmul.f32 %v515, %v361
      %v524 = vmul.f32 %v518, %v361
      %v525 = vmul.f32 %v521, %v361
      %v526 = vadd.f32 %v522, 1e-05
      %v527 = vadd.f32 %v523, 1e-05
      %v528 = vadd.f32 %v524, 1e-05
      %v529 = vadd.f32 %v525, 1e-05
      %v530 = vrsqrt.pop %v526
      %v531 = vmul.f32 %v530, %v526
      %v532 = vmul.f32 %v531, %v530
      %v533 = vmul.f32 0.5, %v532
      %v534 = vsub.f32 1.5, %v533
      %v535 = vmul.f32 %v530, %v534
      %vm536 = vweird.f32 %v526
      %vm537 = vweird.f32 %v530
      %vm538 = vmor %vm536, %vm537
      %v539 = vsel %vm538, %v530, %v535
      %v540 = vrsqrt.pop %v527
      %v541 = vmul.f32 %v540, %v527
      %v542 = vmul.f32 %v541, %v540
      %v543 = vmul.f32 0.5, %v542
      %v544 = vsub.f32 1.5, %v543
      %v545 = vmul.f32 %v540, %v544
      %vm546 = vweird.f32 %v527
      %vm547 = vweird.f32 %v540
      %vm548 = vmor %vm546, %vm547
      %v549 = vsel %vm548, %v540, %v545
      %v550 = vrsqrt.pop %v528
      %v551 = vmul.f32 %v550, %v528
      %v552 = vmul.f32 %v551, %v550
      %v553 = vmul.f32 0.5, %v552
      %v554 = vsub.f32 1.5, %v553
      %v555 = vmul.f32 %v550, %v554
      %vm556 = vweird.f32 %v528
      %vm557 = vweird.f32 %v550
      %vm558 = vmor %vm556, %vm557
      %v559 = vsel %vm558, %v550, %v555
      %v560 = vrsqrt.pop %v529
      %v561 = vmul.f32 %v560, %v529
      %v562 = vmul.f32 %v561, %v560
      %v563 = vmul.f32 0.5, %v562
      %v564 = vsub.f32 1.5, %v563
      %v565 = vmul.f32 %v560, %v564
      %vm566 = vweird.f32 %v529
      %vm567 = vweird.f32 %v560
      %vm568 = vmor %vm566, %vm567
      %v569 = vsel %vm568, %v560, %v565
      %v570 = vmul.f32 %v486, %v539
      %v571 = vmul.f32 %v487, %v549
      %v572 = vmul.f32 %v488, %v559
      %v573 = vmul.f32 %v489, %v569
      %v574 = vperm.slane %v452, 0
      %576 = vrot.lane.b32.xlu0 %v574, 32
      %v577 = vpop.permute.xlu0 %576
      %v579 = vmul.f32 %v570, %v577
      %v580 = vmul.f32 %v571, %v577
      %v581 = vmul.f32 %v572, %v577
      %v582 = vmul.f32 %v573, %v577
      %v583 = vperm.slane %v453, 0
      %585 = vrot.lane.b32.xlu0 %v583, 32
      %v586 = vpop.permute.xlu0 %585
      %v588 = vadd.f32 %v579, %v586
      %v589 = vadd.f32 %v580, %v586
      %v590 = vadd.f32 %v581, %v586
      %v591 = vadd.f32 %v582, %v586
      %v592 = vmax.f32 %v588, 0.0
      %v593 = vmax.f32 %v589, 0.0
      %v594 = vmax.f32 %v590, 0.0
      %v595 = vmax.f32 %v591, 0.0
      %v596 = vld [vmem:[%s5] sm:$0xff]
      %v597 = vld [vmem:[%s5 + $0x8] sm:$0xff]
      %v598 = vld [vmem:[%s5 + $0x10] sm:$0xff]
      %v599 = vld [vmem:[%s5 + $0x18] sm:$0xff]
      %v600 = vld [vmem:[%s6] sm:$0x1]
      %v601 = vperm.slane %v600, 0
      %v603 = vsel %vm342, %v448, 0
      %v606 = vsel %vm342, %v449, 0
      %v609 = vsel %vm342, %v450, 0
      %v612 = vsel %vm342, %v451, 0
      %614 = vmatpush.msra.mxu0 0.0
      %615 = vmatpush.msra.mxu0 0.0
      %616 = vmatpush.msra.mxu0 0.0
      %617 = vmatpush.msra.mxu0 0.0
      %618 = vmatpush.msra.mxu0 0.0
      %619 = vmatpush.msra.mxu0 0.0
      %620 = vmatpush.msra.mxu0 0.0
      %621 = vmatpush.msra.mxu0 0.0
      %622 = vmatpush.msra.mxu0 0.0
      %623 = vmatpush.msra.mxu0 0.0
      %624 = vmatpush.msra.mxu0 0.0
      %625 = vmatpush.msra.mxu0 0.0
      %626 = vmatpush.msra.mxu0 %v599
      %627 = vmatpush.msra.mxu0 %v598
      %628 = vmatpush.msra.mxu0 %v597
      %629 = vmatpush.msra.mxu0 %v596
      %630 = vmatmul.f32.gmra.mxu0 %v603
      %v631 = vpop.f32.mrf.mxu0
      %v632 = vadd.f32 %v601, %v631
      %633 = vmatmul.f32.gmra.mxu0 %v606
      %v634 = vpop.f32.mrf.mxu0
      %v635 = vadd.f32 %v601, %v634
      %636 = vmatmul.f32.gmra.mxu0 %v609
      %v637 = vpop.f32.mrf.mxu0
      %v638 = vadd.f32 %v601, %v637
      %639 = vmatmul.f32.gmra.mxu0 %v612
      %v640 = vpop.f32.mrf.mxu0
      %v641 = vadd.f32 %v601, %v640
      %642 = vdwg.mxu0
      %s643 = scalar_lea.vmem %s5, 32
      %v644 = vld [vmem:[%s643] sm:$0xff]
      %v645 = vld [vmem:[%s643 + $0x8] sm:$0xff]
      %v646 = vld [vmem:[%s643 + $0x10] sm:$0xff]
      %v647 = vld [vmem:[%s643 + $0x18] sm:$0xff]
      %652 = vrot.lane.b32.xlu0 %v592, 96
      %v653 = vpop.permute.xlu0 %652
      %654 = vrot.lane.b32.xlu0 %v593, 96
      %v655 = vpop.permute.xlu0 %654
      %656 = vrot.lane.b32.xlu0 %v594, 96
      %v657 = vpop.permute.xlu0 %656
      %658 = vrot.lane.b32.xlu0 %v595, 96
      %v659 = vpop.permute.xlu0 %658
      %661 = vrot.lane.b32.xlu0 %v601, 112
      %v662 = vpop.permute.xlu0 %661
      %v664 = vsel %vm342, %v653, 0
      %v666 = vsel %vm342, %v655, 0
      %v668 = vsel %vm342, %v657, 0
      %v670 = vsel %vm342, %v659, 0
      %672 = vmatpush.msra.mxu0 0.0
      %673 = vmatpush.msra.mxu0 0.0
      %674 = vmatpush.msra.mxu0 0.0
      %675 = vmatpush.msra.mxu0 0.0
      %676 = vmatpush.msra.mxu0 0.0
      %677 = vmatpush.msra.mxu0 0.0
      %678 = vmatpush.msra.mxu0 0.0
      %679 = vmatpush.msra.mxu0 0.0
      %680 = vmatpush.msra.mxu0 0.0
      %681 = vmatpush.msra.mxu0 0.0
      %682 = vmatpush.msra.mxu0 0.0
      %683 = vmatpush.msra.mxu0 0.0
      %684 = vmatpush.msra.mxu0 %v647
      %685 = vmatpush.msra.mxu0 %v646
      %686 = vmatpush.msra.mxu0 %v645
      %687 = vmatpush.msra.mxu0 %v644
      %688 = vmatmul.f32.gmra.mxu0 %v664
      %v689 = vpop.f32.mrf.mxu0
      %v690 = vadd.f32 %v662, %v689
      %691 = vmatmul.f32.gmra.mxu0 %v666
      %v692 = vpop.f32.mrf.mxu0
      %v693 = vadd.f32 %v662, %v692
      %694 = vmatmul.f32.gmra.mxu0 %v668
      %v695 = vpop.f32.mrf.mxu0
      %v696 = vadd.f32 %v662, %v695
      %697 = vmatmul.f32.gmra.mxu0 %v670
      %v698 = vpop.f32.mrf.mxu0
      %v699 = vadd.f32 %v662, %v698
      %700 = vdwg.mxu0
      %v701 = vmax.f32 %v632, -5.0
      %v702 = vmax.f32 %v635, -5.0
      %v703 = vmax.f32 %v638, -5.0
      %v704 = vmax.f32 %v641, -5.0
      %v705 = vmin.f32 %v701, 5.0
      %v706 = vmin.f32 %v702, 5.0
      %v707 = vmin.f32 %v703, 5.0
      %v708 = vmin.f32 %v704, 5.0
      %v709 = vmul.f32 %v705, 1.442695
      %v710 = vpow.pop %v709
      %v711 = vmul.f32 %v706, 1.442695
      %v712 = vpow.pop %v711
      %v713 = vmul.f32 %v707, 1.442695
      %v714 = vpow.pop %v713
      %v715 = vmul.f32 %v708, 1.442695
      %v716 = vpow.pop %v715
      %v717 = vmul.f32 %v282, %v710
      %v718 = vmul.f32 %v283, %v712
      %v719 = vmul.f32 %v284, %v714
      %v720 = vmul.f32 %v285, %v716
      %v721 = vadd.f32 %v717, %v690
      %v722 = vadd.f32 %v718, %v693
      %v723 = vadd.f32 %v719, %v696
      %v724 = vadd.f32 %v720, %v699
      %s725 = scalar_lea.vmem %s1, 16
      %v726 = vld [vmem:[%s725] sm:$0xff]
      %v727 = vld [vmem:[%s725 + $0x8] sm:$0xff]
      %v728 = vld [vmem:[%s2 + $0x1] sm:$0x1]
      %v729 = vperm.slane %v728, 0
      %v731 = vsel %vm302, %v721, 0
      %v734 = vsel %vm302, %v722, 0
      %v737 = vsel %vm302, %v723, 0
      %v740 = vsel %vm302, %v724, 0
      %742 = vmatpush.msra.mxu0 0.0
      %743 = vmatpush.msra.mxu0 0.0
      %744 = vmatpush.msra.mxu0 0.0
      %745 = vmatpush.msra.mxu0 0.0
      %746 = vmatpush.msra.mxu0 0.0
      %747 = vmatpush.msra.mxu0 0.0
      %748 = vmatpush.msra.mxu0 0.0
      %749 = vmatpush.msra.mxu0 0.0
      %750 = vmatpush.msra.mxu0 0.0
      %751 = vmatpush.msra.mxu0 0.0
      %752 = vmatpush.msra.mxu0 0.0
      %753 = vmatpush.msra.mxu0 0.0
      %754 = vmatpush.msra.mxu0 0.0
      %755 = vmatpush.msra.mxu0 0.0
      %756 = vmatpush.msra.mxu0 %v727
      %757 = vmatpush.msra.mxu0 %v726
      %758 = vmatmul.f32.gmra.mxu0 %v731
      %v759 = vpop.f32.mrf.mxu0
      %v760 = vadd.f32 %v729, %v759
      %761 = vmatmul.f32.gmra.mxu0 %v734
      %v762 = vpop.f32.mrf.mxu0
      %v763 = vadd.f32 %v729, %v762
      %764 = vmatmul.f32.gmra.mxu0 %v737
      %v765 = vpop.f32.mrf.mxu0
      %v766 = vadd.f32 %v729, %v765
      %767 = vmatmul.f32.gmra.mxu0 %v740
      %v768 = vpop.f32.mrf.mxu0
      %v769 = vadd.f32 %v729, %v768
      %770 = vdwg.mxu0
      %v771 = vld [vmem:[%s3 + $0x2] sm:$0x1]
      %v772 = vld [vmem:[%s4 + $0x2] sm:$0x1]
      %v773 = vsel %vm342, %v760, 0.0
      %774 = vadd.xlane.f32.xlu0 %v773
      %v775 = vpop.xlane.xlu0 %774
      %v776 = vsel %vm342, %v763, 0.0
      %777 = vadd.xlane.f32.xlu0 %v776
      %v778 = vpop.xlane.xlu0 %777
      %v779 = vsel %vm342, %v766, 0.0
      %780 = vadd.xlane.f32.xlu0 %v779
      %v781 = vpop.xlane.xlu0 %780
      %v782 = vsel %vm342, %v769, 0.0
      %783 = vadd.xlane.f32.xlu0 %v782
      %v784 = vpop.xlane.xlu0 %783
      %v785 = vmul.f32 %v775, %v361
      %v786 = vmul.f32 %v778, %v361
      %v787 = vmul.f32 %v781, %v361
      %v788 = vmul.f32 %v784, %v361
      %v789 = vsub.f32 %v760, %v785
      %v790 = vsub.f32 %v763, %v786
      %v791 = vsub.f32 %v766, %v787
      %v792 = vsub.f32 %v769, %v788
      %v793 = vmul.f32 %v789, %v789
      %v794 = vmul.f32 %v790, %v790
      %v795 = vmul.f32 %v791, %v791
      %v796 = vmul.f32 %v792, %v792
      %v797 = vsel %vm342, %v793, 0.0
      %798 = vadd.xlane.f32.xlu0 %v797
      %v799 = vpop.xlane.xlu0 %798
      %v800 = vsel %vm342, %v794, 0.0
      %801 = vadd.xlane.f32.xlu0 %v800
      %v802 = vpop.xlane.xlu0 %801
      %v803 = vsel %vm342, %v795, 0.0
      %804 = vadd.xlane.f32.xlu0 %v803
      %v805 = vpop.xlane.xlu0 %804
      %v806 = vsel %vm342, %v796, 0.0
      %807 = vadd.xlane.f32.xlu0 %v806
      %v808 = vpop.xlane.xlu0 %807
      %v809 = vmul.f32 %v799, %v361
      %v810 = vmul.f32 %v802, %v361
      %v811 = vmul.f32 %v805, %v361
      %v812 = vmul.f32 %v808, %v361
      %v813 = vadd.f32 %v809, 1e-05
      %v814 = vadd.f32 %v810, 1e-05
      %v815 = vadd.f32 %v811, 1e-05
      %v816 = vadd.f32 %v812, 1e-05
      %v817 = vrsqrt.pop %v813
      %v818 = vmul.f32 %v817, %v813
      %v819 = vmul.f32 %v818, %v817
      %v820 = vmul.f32 0.5, %v819
      %v821 = vsub.f32 1.5, %v820
      %v822 = vmul.f32 %v817, %v821
      %vm823 = vweird.f32 %v813
      %vm824 = vweird.f32 %v817
      %vm825 = vmor %vm823, %vm824
      %v826 = vsel %vm825, %v817, %v822
      %v827 = vrsqrt.pop %v814
      %v828 = vmul.f32 %v827, %v814
      %v829 = vmul.f32 %v828, %v827
      %v830 = vmul.f32 0.5, %v829
      %v831 = vsub.f32 1.5, %v830
      %v832 = vmul.f32 %v827, %v831
      %vm833 = vweird.f32 %v814
      %vm834 = vweird.f32 %v827
      %vm835 = vmor %vm833, %vm834
      %v836 = vsel %vm835, %v827, %v832
      %v837 = vrsqrt.pop %v815
      %v838 = vmul.f32 %v837, %v815
      %v839 = vmul.f32 %v838, %v837
      %v840 = vmul.f32 0.5, %v839
      %v841 = vsub.f32 1.5, %v840
      %v842 = vmul.f32 %v837, %v841
      %vm843 = vweird.f32 %v815
      %vm844 = vweird.f32 %v837
      %vm845 = vmor %vm843, %vm844
      %v846 = vsel %vm845, %v837, %v842
      %v847 = vrsqrt.pop %v816
      %v848 = vmul.f32 %v847, %v816
      %v849 = vmul.f32 %v848, %v847
      %v850 = vmul.f32 0.5, %v849
      %v851 = vsub.f32 1.5, %v850
      %v852 = vmul.f32 %v847, %v851
      %vm853 = vweird.f32 %v816
      %vm854 = vweird.f32 %v847
      %vm855 = vmor %vm853, %vm854
      %v856 = vsel %vm855, %v847, %v852
      %v857 = vmul.f32 %v789, %v826
      %v858 = vmul.f32 %v790, %v836
      %v859 = vmul.f32 %v791, %v846
      %v860 = vmul.f32 %v792, %v856
      %v861 = vperm.slane %v771, 0
      %v862 = vmul.f32 %v857, %v861
      %v863 = vmul.f32 %v858, %v861
      %v864 = vmul.f32 %v859, %v861
      %v865 = vmul.f32 %v860, %v861
      %v866 = vperm.slane %v772, 0
      %v867 = vadd.f32 %v862, %v866
      %v868 = vadd.f32 %v863, %v866
      %v869 = vadd.f32 %v864, %v866
      %v870 = vadd.f32 %v865, %v866
      %v871 = vmax.f32 %v867, 0.0
      %v872 = vmax.f32 %v868, 0.0
      %v873 = vmax.f32 %v869, 0.0
      %v874 = vmax.f32 %v870, 0.0
      %v875 = vld [vmem:[%s3 + $0x3] sm:$0x1]
      %v876 = vld [vmem:[%s4 + $0x3] sm:$0x1]
      %881 = vrot.lane.b32.xlu0 %v760, 96
      %v882 = vpop.permute.xlu0 %881
      %883 = vrot.lane.b32.xlu0 %v763, 96
      %v884 = vpop.permute.xlu0 %883
      %885 = vrot.lane.b32.xlu0 %v766, 96
      %v886 = vpop.permute.xlu0 %885
      %887 = vrot.lane.b32.xlu0 %v769, 96
      %v888 = vpop.permute.xlu0 %887
      %v893 = vsel %vm342, %v882, 0.0
      %894 = vadd.xlane.f32.xlu0 %v893
      %v895 = vpop.xlane.xlu0 %894
      %v896 = vsel %vm342, %v884, 0.0
      %897 = vadd.xlane.f32.xlu0 %v896
      %v898 = vpop.xlane.xlu0 %897
      %v899 = vsel %vm342, %v886, 0.0
      %900 = vadd.xlane.f32.xlu0 %v899
      %v901 = vpop.xlane.xlu0 %900
      %v902 = vsel %vm342, %v888, 0.0
      %903 = vadd.xlane.f32.xlu0 %v902
      %v904 = vpop.xlane.xlu0 %903
      %v905 = vmul.f32 %v895, %v361
      %v906 = vmul.f32 %v898, %v361
      %v907 = vmul.f32 %v901, %v361
      %v908 = vmul.f32 %v904, %v361
      %v909 = vsub.f32 %v760, %v905
      %v910 = vsub.f32 %v763, %v906
      %v911 = vsub.f32 %v766, %v907
      %v912 = vsub.f32 %v769, %v908
      %v913 = vmul.f32 %v909, %v909
      %v914 = vmul.f32 %v910, %v910
      %v915 = vmul.f32 %v911, %v911
      %v916 = vmul.f32 %v912, %v912
      %921 = vrot.lane.b32.xlu0 %v913, 96
      %v922 = vpop.permute.xlu0 %921
      %923 = vrot.lane.b32.xlu0 %v914, 96
      %v924 = vpop.permute.xlu0 %923
      %925 = vrot.lane.b32.xlu0 %v915, 96
      %v926 = vpop.permute.xlu0 %925
      %927 = vrot.lane.b32.xlu0 %v916, 96
      %v928 = vpop.permute.xlu0 %927
      %v933 = vsel %vm342, %v922, 0.0
      %934 = vadd.xlane.f32.xlu0 %v933
      %v935 = vpop.xlane.xlu0 %934
      %v936 = vsel %vm342, %v924, 0.0
      %937 = vadd.xlane.f32.xlu0 %v936
      %v938 = vpop.xlane.xlu0 %937
      %v939 = vsel %vm342, %v926, 0.0
      %940 = vadd.xlane.f32.xlu0 %v939
      %v941 = vpop.xlane.xlu0 %940
      %v942 = vsel %vm342, %v928, 0.0
      %943 = vadd.xlane.f32.xlu0 %v942
      %v944 = vpop.xlane.xlu0 %943
      %v945 = vmul.f32 %v935, %v361
      %v946 = vmul.f32 %v938, %v361
      %v947 = vmul.f32 %v941, %v361
      %v948 = vmul.f32 %v944, %v361
      %v949 = vadd.f32 %v945, 1e-05
      %v950 = vadd.f32 %v946, 1e-05
      %v951 = vadd.f32 %v947, 1e-05
      %v952 = vadd.f32 %v948, 1e-05
      %v953 = vrsqrt.pop %v949
      %v954 = vmul.f32 %v953, %v949
      %v955 = vmul.f32 %v954, %v953
      %v956 = vmul.f32 0.5, %v955
      %v957 = vsub.f32 1.5, %v956
      %v958 = vmul.f32 %v953, %v957
      %vm959 = vweird.f32 %v949
      %vm960 = vweird.f32 %v953
      %vm961 = vmor %vm959, %vm960
      %v962 = vsel %vm961, %v953, %v958
      %v963 = vrsqrt.pop %v950
      %v964 = vmul.f32 %v963, %v950
      %v965 = vmul.f32 %v964, %v963
      %v966 = vmul.f32 0.5, %v965
      %v967 = vsub.f32 1.5, %v966
      %v968 = vmul.f32 %v963, %v967
      %vm969 = vweird.f32 %v950
      %vm970 = vweird.f32 %v963
      %vm971 = vmor %vm969, %vm970
      %v972 = vsel %vm971, %v963, %v968
      %v973 = vrsqrt.pop %v951
      %v974 = vmul.f32 %v973, %v951
      %v975 = vmul.f32 %v974, %v973
      %v976 = vmul.f32 0.5, %v975
      %v977 = vsub.f32 1.5, %v976
      %v978 = vmul.f32 %v973, %v977
      %vm979 = vweird.f32 %v951
      %vm980 = vweird.f32 %v973
      %vm981 = vmor %vm979, %vm980
      %v982 = vsel %vm981, %v973, %v978
      %v983 = vrsqrt.pop %v952
      %v984 = vmul.f32 %v983, %v952
      %v985 = vmul.f32 %v984, %v983
      %v986 = vmul.f32 0.5, %v985
      %v987 = vsub.f32 1.5, %v986
      %v988 = vmul.f32 %v983, %v987
      %vm989 = vweird.f32 %v952
      %vm990 = vweird.f32 %v983
      %vm991 = vmor %vm989, %vm990
      %v992 = vsel %vm991, %v983, %v988
      %v993 = vmul.f32 %v909, %v962
      %v994 = vmul.f32 %v910, %v972
      %v995 = vmul.f32 %v911, %v982
      %v996 = vmul.f32 %v912, %v992
      %v997 = vperm.slane %v875, 0
      %999 = vrot.lane.b32.xlu0 %v997, 32
      %v1000 = vpop.permute.xlu0 %999
      %v1002 = vmul.f32 %v993, %v1000
      %v1003 = vmul.f32 %v994, %v1000
      %v1004 = vmul.f32 %v995, %v1000
      %v1005 = vmul.f32 %v996, %v1000
      %v1006 = vperm.slane %v876, 0
      %1008 = vrot.lane.b32.xlu0 %v1006, 32
      %v1009 = vpop.permute.xlu0 %1008
      %v1011 = vadd.f32 %v1002, %v1009
      %v1012 = vadd.f32 %v1003, %v1009
      %v1013 = vadd.f32 %v1004, %v1009
      %v1014 = vadd.f32 %v1005, %v1009
      %v1015 = vmax.f32 %v1011, 0.0
      %v1016 = vmax.f32 %v1012, 0.0
      %v1017 = vmax.f32 %v1013, 0.0
      %v1018 = vmax.f32 %v1014, 0.0
      %s1019 = scalar_lea.vmem %s5, 64
      %v1020 = vld [vmem:[%s1019] sm:$0xff]
      %v1021 = vld [vmem:[%s1019 + $0x8] sm:$0xff]
      %v1022 = vld [vmem:[%s1019 + $0x10] sm:$0xff]
      %v1023 = vld [vmem:[%s1019 + $0x18] sm:$0xff]
      %v1024 = vld [vmem:[%s6 + $0x1] sm:$0x1]
      %v1025 = vperm.slane %v1024, 0
      %v1027 = vsel %vm342, %v871, 0
      %v1030 = vsel %vm342, %v872, 0
      %v1033 = vsel %vm342, %v873, 0
      %v1036 = vsel %vm342, %v874, 0
      %1038 = vmatpush.msra.mxu0 0.0
      %1039 = vmatpush.msra.mxu0 0.0
      %1040 = vmatpush.msra.mxu0 0.0
      %1041 = vmatpush.msra.mxu0 0.0
      %1042 = vmatpush.msra.mxu0 0.0
      %1043 = vmatpush.msra.mxu0 0.0
      %1044 = vmatpush.msra.mxu0 0.0
      %1045 = vmatpush.msra.mxu0 0.0
      %1046 = vmatpush.msra.mxu0 0.0
      %1047 = vmatpush.msra.mxu0 0.0
      %1048 = vmatpush.msra.mxu0 0.0
      %1049 = vmatpush.msra.mxu0 0.0
      %1050 = vmatpush.msra.mxu0 %v1023
      %1051 = vmatpush.msra.mxu0 %v1022
      %1052 = vmatpush.msra.mxu0 %v1021
      %1053 = vmatpush.msra.mxu0 %v1020
      %1054 = vmatmul.f32.gmra.mxu0 %v1027
      %v1055 = vpop.f32.mrf.mxu0
      %v1056 = vadd.f32 %v1025, %v1055
      %1057 = vmatmul.f32.gmra.mxu0 %v1030
      %v1058 = vpop.f32.mrf.mxu0
      %v1059 = vadd.f32 %v1025, %v1058
      %1060 = vmatmul.f32.gmra.mxu0 %v1033
      %v1061 = vpop.f32.mrf.mxu0
      %v1062 = vadd.f32 %v1025, %v1061
      %1063 = vmatmul.f32.gmra.mxu0 %v1036
      %v1064 = vpop.f32.mrf.mxu0
      %v1065 = vadd.f32 %v1025, %v1064
      %1066 = vdwg.mxu0
      %s1067 = scalar_lea.vmem %s5, 96
      %v1068 = vld [vmem:[%s1067] sm:$0xff]
      %v1069 = vld [vmem:[%s1067 + $0x8] sm:$0xff]
      %v1070 = vld [vmem:[%s1067 + $0x10] sm:$0xff]
      %v1071 = vld [vmem:[%s1067 + $0x18] sm:$0xff]
      %1076 = vrot.lane.b32.xlu0 %v1015, 96
      %v1077 = vpop.permute.xlu0 %1076
      %1078 = vrot.lane.b32.xlu0 %v1016, 96
      %v1079 = vpop.permute.xlu0 %1078
      %1080 = vrot.lane.b32.xlu0 %v1017, 96
      %v1081 = vpop.permute.xlu0 %1080
      %1082 = vrot.lane.b32.xlu0 %v1018, 96
      %v1083 = vpop.permute.xlu0 %1082
      %1085 = vrot.lane.b32.xlu0 %v1025, 112
      %v1086 = vpop.permute.xlu0 %1085
      %v1088 = vsel %vm342, %v1077, 0
      %v1090 = vsel %vm342, %v1079, 0
      %v1092 = vsel %vm342, %v1081, 0
      %v1094 = vsel %vm342, %v1083, 0
      %1096 = vmatpush.msra.mxu0 0.0
      %1097 = vmatpush.msra.mxu0 0.0
      %1098 = vmatpush.msra.mxu0 0.0
      %1099 = vmatpush.msra.mxu0 0.0
      %1100 = vmatpush.msra.mxu0 0.0
      %1101 = vmatpush.msra.mxu0 0.0
      %1102 = vmatpush.msra.mxu0 0.0
      %1103 = vmatpush.msra.mxu0 0.0
      %1104 = vmatpush.msra.mxu0 0.0
      %1105 = vmatpush.msra.mxu0 0.0
      %1106 = vmatpush.msra.mxu0 0.0
      %1107 = vmatpush.msra.mxu0 0.0
      %1108 = vmatpush.msra.mxu0 %v1071
      %1109 = vmatpush.msra.mxu0 %v1070
      %1110 = vmatpush.msra.mxu0 %v1069
      %1111 = vmatpush.msra.mxu0 %v1068
      %1112 = vmatmul.f32.gmra.mxu0 %v1088
      %v1113 = vpop.f32.mrf.mxu0
      %v1114 = vadd.f32 %v1086, %v1113
      %1115 = vmatmul.f32.gmra.mxu0 %v1090
      %v1116 = vpop.f32.mrf.mxu0
      %v1117 = vadd.f32 %v1086, %v1116
      %1118 = vmatmul.f32.gmra.mxu0 %v1092
      %v1119 = vpop.f32.mrf.mxu0
      %v1120 = vadd.f32 %v1086, %v1119
      %1121 = vmatmul.f32.gmra.mxu0 %v1094
      %v1122 = vpop.f32.mrf.mxu0
      %v1123 = vadd.f32 %v1086, %v1122
      %1124 = vdwg.mxu0
      %v1125 = vmax.f32 %v1056, -5.0
      %v1126 = vmax.f32 %v1059, -5.0
      %v1127 = vmax.f32 %v1062, -5.0
      %v1128 = vmax.f32 %v1065, -5.0
      %v1129 = vmin.f32 %v1125, 5.0
      %v1130 = vmin.f32 %v1126, 5.0
      %v1131 = vmin.f32 %v1127, 5.0
      %v1132 = vmin.f32 %v1128, 5.0
      %v1133 = vmul.f32 %v1129, 1.442695
      %v1134 = vpow.pop %v1133
      %v1135 = vmul.f32 %v1130, 1.442695
      %v1136 = vpow.pop %v1135
      %v1137 = vmul.f32 %v1131, 1.442695
      %v1138 = vpow.pop %v1137
      %v1139 = vmul.f32 %v1132, 1.442695
      %v1140 = vpow.pop %v1139
      %1145 = vrot.lane.b32.xlu0 %v1134, 16
      %v1146 = vpop.permute.xlu0 %1145
      %1147 = vrot.lane.b32.xlu0 %v1136, 16
      %v1148 = vpop.permute.xlu0 %1147
      %1149 = vrot.lane.b32.xlu0 %v1138, 16
      %v1150 = vpop.permute.xlu0 %1149
      %1151 = vrot.lane.b32.xlu0 %v1140, 16
      %v1152 = vpop.permute.xlu0 %1151
      %v1157 = vmul.f32 %v282, %v1146
      %v1158 = vmul.f32 %v283, %v1148
      %v1159 = vmul.f32 %v284, %v1150
      %v1160 = vmul.f32 %v285, %v1152
      %1165 = vrot.lane.b32.xlu0 %v1114, 16
      %v1166 = vpop.permute.xlu0 %1165
      %1167 = vrot.lane.b32.xlu0 %v1117, 16
      %v1168 = vpop.permute.xlu0 %1167
      %1169 = vrot.lane.b32.xlu0 %v1120, 16
      %v1170 = vpop.permute.xlu0 %1169
      %1171 = vrot.lane.b32.xlu0 %v1123, 16
      %v1172 = vpop.permute.xlu0 %1171
      %v1177 = vadd.f32 %v1157, %v1166
      %v1178 = vadd.f32 %v1158, %v1168
      %v1179 = vadd.f32 %v1159, %v1170
      %v1180 = vadd.f32 %v1160, %v1172
      %1181 = vst.msk [vmem:[%s280] sm:$0xff] %vm302, %v721
      %1182 = vst.msk [vmem:[%s280 + $0x8] sm:$0xff] %vm302, %v722
      %1183 = vst.msk [vmem:[%s280 + $0x10] sm:$0xff] %vm302, %v723
      %1184 = vst.msk [vmem:[%s280 + $0x18] sm:$0xff] %vm302, %v724
      %vm1185 = vcmask 261248
      %1186 = vst.msk [vmem:[%s280] sm:$0xff] %vm1185, %v1177
      %1187 = vst.msk [vmem:[%s280 + $0x8] sm:$0xff] %vm1185, %v1178
      %1188 = vst.msk [vmem:[%s280 + $0x10] sm:$0xff] %vm1185, %v1179
      %1189 = vst.msk [vmem:[%s280 + $0x18] sm:$0xff] %vm1185, %v1180
      %s1190 = smul.u32 4, %s18
      %p1191 = scmp.lt.s32.totalorder %s1190, 15
      %s1192 = scalar_select %p1191, %s1190, 15
      %s1193 = smul.addr %s1192, 8
      %s1194 = scalar_lea.vmem %s7, %s1193
      // Predicated region
      $region49: #{_interaction_call.1} parent=47 // pred_check
        %p1195 = pneg %p188
      $region50: #{_interaction_call.1} parent=47 // pred_check_branch
        %1197 = sbr.rel (%p1195) target = $region52
      $region51: #{_interaction_call.1} parent=47 // pred_region
        %s1198 = smul.u32 4, %s18
      $region52: #{_interaction_call.1} parent=47 // pred_fallthru
        _
    $region48: #{_interaction_call.1} parent=5 // pred_fallthru
      _
    %p1199 = scmp.le.s32.totalorder 2, %s13
    // Predicated region
    $region53: #{_interaction_call.1} parent=5 // pred_check
      %p1200 = pneg %p1199
    $region54: #{_interaction_call.1} parent=5 // pred_check_branch
      %1202 = sbr.rel (%p1200) target = $region56
    $region55: #{_interaction_call.1} parent=5 // pred_region
      %s1203 = ssub.s32 %s13, 2
      // Predicated region
      $region57: #{_interaction_call.1} parent=55 // pred_check
        %p1204 = pneg %p194
      $region58: #{_interaction_call.1} parent=55 // pred_check_branch
        %1206 = sbr.rel (%p1204) target = $region60
      $region59: #{_interaction_call.1} parent=55 // pred_region
        %s1207 = smul.u32 4, %s19
        %p1208 = scmp.lt.s32.totalorder %s1207, 15
        %s1209 = scalar_select %p1208, %s1207, 15
        %s1210 = smul.addr %s1209, 8
        %s1211 = scalar_lea.vmem %s7, %s1210
      $region60: #{_interaction_call.1} parent=55 // pred_fallthru
        _
    $region56: #{_interaction_call.1} parent=5 // pred_fallthru
      _
  $region6: #{_interaction_call.1} parent=0 // loop_footer
    %s17 = sadd.s32 1, %s13
  $region7: #{_interaction_call.1} parent=0 // loop_footer_branch
    %12 = sbr.rel target = $region3
  $region8: #{_interaction_call.1} parent=0 // loop_exit
    _

// kernel: _interaction_call.1
$region0: #{_interaction_call.1}
  #allocation0 [shape = 'u32[]', space=smem, size = 0x4, offset = 0x4, fixed_abs, tag = 'smem constant byte address 0x4 - core index']
  #allocation1 [shape = 'u32[72,128]{1,0:T(1,128)}', space=vmem, size = 0x9000, scoped, tag = 'internal scratch']
  %s0 = inlined_call_operand.vmem [shape: f32[128,32], index: 0, kind: input, shape index: {}]
  %s1 = inlined_call_operand.vmem [shape: f32[2,16,64], index: 1, kind: input, shape index: {}]
  %s2 = inlined_call_operand.vmem [shape: f32[2,64], index: 2, kind: input, shape index: {}]
  %s3 = inlined_call_operand.vmem [shape: f32[4,32], index: 3, kind: input, shape index: {}]
  %s4 = inlined_call_operand.vmem [shape: f32[4,32], index: 4, kind: input, shape index: {}]
  %s5 = inlined_call_operand.vmem [shape: f32[2,2,32,16], index: 5, kind: input, shape index: {}]
  %s6 = inlined_call_operand.vmem [shape: f32[2,32], index: 6, kind: input, shape index: {}]
  %s7 = inlined_call_operand.vmem [shape: f32[128,32], index: 7, kind: output, shape index: {}]
  %s8 = sld [smem:[#allocation0]]
  $region61: #{_interaction_call.1} parent=0
    _
  %s10 = ssub.s32 1, %s8
  %s11 = scalar_select 0, %s10, %s8
  loop: start=0, step=1, limit=6
  $region2: #{_interaction_call.1} parent=0 // loop_pre_header
    _
  $region3: #{_interaction_call.1} parent=0 // loop_header
    %s13 = sphi 0, %s17
    %p14 = scmp.ge.s32.totalorder %s13, 6
    %s23 = sphi 0, %s25
    %s26 = sphi 0, %s23
    %s27 = sphi 0, %s26
    %s43 = sphi 0, %s27
    %s47 = sphi 0, %s47
    %s49 = sphi 0, %s47
    %s50 = sphi 0, %s49
    %s64 = sphi 0, %s50
    %s68 = sphi 0, %s68
    %s70 = sphi 0, %s68
    %s71 = sphi 0, %s70
    %s85 = sphi 0, %s71
    %s89 = sphi 0, %s89
    %s91 = sphi 0, %s89
    %s92 = sphi 0, %s91
    %s106 = sphi 0, %s92
    %s110 = sphi 0, %s110
    %s112 = sphi 0, %s110
    %s113 = sphi 0, %s112
    %s127 = sphi 0, %s113
    %s131 = sphi 0, %s131
    %s133 = sphi 0, %s131
    %s134 = sphi 0, %s133
    %s148 = sphi 0, %s134
    %s152 = sphi 0, %s152
    %s154 = sphi 0, %s152
    %s155 = sphi 0, %s154
    %s169 = sphi 0, %s155
    %s175 = sphi 0, %s177
    %s178 = sphi 0, %s175
    %s179 = sphi 0, %s178
    %s195 = sphi 0, %s179
  $region4: #{_interaction_call.1} parent=0 // loop_header_branch
    %16 = sbr.rel (%p14) target = $region8
  $region5: #{_interaction_call.1} parent=0 // loop_body
    %s18 = ssub.s32 %s13, 1
    %s19 = ssub.s32 %s13, 2
    %s20 = sadd.s32 %s13, 1
    %s21 = ssub.s32 %s13, %s20
    %p22 = scmp.eq.s32.totalorder %s21, 0
    %s24 = sadd.s32 %s23, 1
    %s25 = scalar_select %p22, %s23, %s24
    %p28 = pneg %p22
    %p29 = scmp.eq.s32.totalorder %s13, 3
    %p30 = por %p28, %p29
    %p31 = scmp.ne.s32.totalorder %s23, %s26
    %p32 = scmp.eq.s32.totalorder %s13, 0
    %p33 = por %p31, %p32
    %p34 = scmp.ne.s32.totalorder %s23, %s26
    %p35 = scmp.eq.s32.totalorder %s18, 3
    %p36 = por %p34, %p35
    %p37 = scmp.ne.s32.totalorder %s26, %s27
    %p38 = scmp.eq.s32.totalorder %s18, 0
    %p39 = por %p37, %p38
    %p40 = scmp.ne.s32.totalorder %s26, %s27
    %p41 = scmp.eq.s32.totalorder %s19, 3
    %p42 = por %p40, %p41
    %p44 = scmp.ne.s32.totalorder %s27, %s43
    %p45 = scmp.eq.s32.totalorder %s19, 0
    %p46 = por %p44, %p45
    %s48 = sadd.s32 %s47, 1
    %p51 = scmp.eq.s32.totalorder %s13, 3
    %p52 = scmp.ne.s32.totalorder %s47, %s49
    %p53 = scmp.eq.s32.totalorder %s13, 0
    %p54 = por %p52, %p53
    %p55 = scmp.ne.s32.totalorder %s47, %s49
    %p56 = scmp.eq.s32.totalorder %s18, 3
    %p57 = por %p55, %p56
    %p58 = scmp.ne.s32.totalorder %s49, %s50
    %p59 = scmp.eq.s32.totalorder %s18, 0
    %p60 = por %p58, %p59
    %p61 = scmp.ne.s32.totalorder %s49, %s50
    %p62 = scmp.eq.s32.totalorder %s19, 3
    %p63 = por %p61, %p62
    %p65 = scmp.ne.s32.totalorder %s50, %s64
    %p66 = scmp.eq.s32.totalorder %s19, 0
    %p67 = por %p65, %p66
    %s69 = sadd.s32 %s68, 1
    %p72 = scmp.eq.s32.totalorder %s13, 3
    %p73 = scmp.ne.s32.totalorder %s68, %s70
    %p74 = scmp.eq.s32.totalorder %s13, 0
    %p75 = por %p73, %p74
    %p76 = scmp.ne.s32.totalorder %s68, %s70
    %p77 = scmp.eq.s32.totalorder %s18, 3
    %p78 = por %p76, %p77
    %p79 = scmp.ne.s32.totalorder %s70, %s71
    %p80 = scmp.eq.s32.totalorder %s18, 0
    %p81 = por %p79, %p80
    %p82 = scmp.ne.s32.totalorder %s70, %s71
    %p83 = scmp.eq.s32.totalorder %s19, 3
    %p84 = por %p82, %p83
    %p86 = scmp.ne.s32.totalorder %s71, %s85
    %p87 = scmp.eq.s32.totalorder %s19, 0
    %p88 = por %p86, %p87
    %s90 = sadd.s32 %s89, 1
    %p93 = scmp.eq.s32.totalorder %s13, 3
    %p94 = scmp.ne.s32.totalorder %s89, %s91
    %p95 = scmp.eq.s32.totalorder %s13, 0
    %p96 = por %p94, %p95
    %p97 = scmp.ne.s32.totalorder %s89, %s91
    %p98 = scmp.eq.s32.totalorder %s18, 3
    %p99 = por %p97, %p98
    %p100 = scmp.ne.s32.totalorder %s91, %s92
    %p101 = scmp.eq.s32.totalorder %s18, 0
    %p102 = por %p100, %p101
    %p103 = scmp.ne.s32.totalorder %s91, %s92
    %p104 = scmp.eq.s32.totalorder %s19, 3
    %p105 = por %p103, %p104
    %p107 = scmp.ne.s32.totalorder %s92, %s106
    %p108 = scmp.eq.s32.totalorder %s19, 0
    %p109 = por %p107, %p108
    %s111 = sadd.s32 %s110, 1
    %p114 = scmp.eq.s32.totalorder %s13, 3
    %p115 = scmp.ne.s32.totalorder %s110, %s112
    %p116 = scmp.eq.s32.totalorder %s13, 0
    %p117 = por %p115, %p116
    %p118 = scmp.ne.s32.totalorder %s110, %s112
    %p119 = scmp.eq.s32.totalorder %s18, 3
    %p120 = por %p118, %p119
    %p121 = scmp.ne.s32.totalorder %s112, %s113
    %p122 = scmp.eq.s32.totalorder %s18, 0
    %p123 = por %p121, %p122
    %p124 = scmp.ne.s32.totalorder %s112, %s113
    %p125 = scmp.eq.s32.totalorder %s19, 3
    %p126 = por %p124, %p125
    %p128 = scmp.ne.s32.totalorder %s113, %s127
    %p129 = scmp.eq.s32.totalorder %s19, 0
    %p130 = por %p128, %p129
    %s132 = sadd.s32 %s131, 1
    %p135 = scmp.eq.s32.totalorder %s13, 3
    %p136 = scmp.ne.s32.totalorder %s131, %s133
    %p137 = scmp.eq.s32.totalorder %s13, 0
    %p138 = por %p136, %p137
    %p139 = scmp.ne.s32.totalorder %s131, %s133
    %p140 = scmp.eq.s32.totalorder %s18, 3
    %p141 = por %p139, %p140
    %p142 = scmp.ne.s32.totalorder %s133, %s134
    %p143 = scmp.eq.s32.totalorder %s18, 0
    %p144 = por %p142, %p143
    %p145 = scmp.ne.s32.totalorder %s133, %s134
    %p146 = scmp.eq.s32.totalorder %s19, 3
    %p147 = por %p145, %p146
    %p149 = scmp.ne.s32.totalorder %s134, %s148
    %p150 = scmp.eq.s32.totalorder %s19, 0
    %p151 = por %p149, %p150
    %s153 = sadd.s32 %s152, 1
    %p156 = scmp.eq.s32.totalorder %s13, 3
    %p157 = scmp.ne.s32.totalorder %s152, %s154
    %p158 = scmp.eq.s32.totalorder %s13, 0
    %p159 = por %p157, %p158
    %p160 = scmp.ne.s32.totalorder %s152, %s154
    %p161 = scmp.eq.s32.totalorder %s18, 3
    %p162 = por %p160, %p161
    %p163 = scmp.ne.s32.totalorder %s154, %s155
    %p164 = scmp.eq.s32.totalorder %s18, 0
    %p165 = por %p163, %p164
    %p166 = scmp.ne.s32.totalorder %s154, %s155
    %p167 = scmp.eq.s32.totalorder %s19, 3
    %p168 = por %p166, %p167
    %p170 = scmp.ne.s32.totalorder %s155, %s169
    %p171 = scmp.eq.s32.totalorder %s19, 0
    %p172 = por %p170, %p171
    %s173 = ssub.s32 %s13, %s20
    %p174 = scmp.eq.s32.totalorder %s173, 0
    %s176 = sadd.s32 %s175, 1
    %s177 = scalar_select %p174, %s175, %s176
    %p180 = pneg %p174
    %p181 = scmp.eq.s32.totalorder %s13, 3
    %p182 = por %p180, %p181
    %p183 = scmp.ne.s32.totalorder %s175, %s178
    %p184 = scmp.eq.s32.totalorder %s13, 0
    %p185 = por %p183, %p184
    %p186 = scmp.ne.s32.totalorder %s175, %s178
    %p187 = scmp.eq.s32.totalorder %s18, 3
    %p188 = por %p186, %p187
    %p189 = scmp.ne.s32.totalorder %s178, %s179
    %p190 = scmp.eq.s32.totalorder %s18, 0
    %p191 = por %p189, %p190
    %p192 = scmp.ne.s32.totalorder %s178, %s179
    %p193 = scmp.eq.s32.totalorder %s19, 3
    %p194 = por %p192, %p193
    %p196 = scmp.ne.s32.totalorder %s179, %s195
    %p197 = scmp.eq.s32.totalorder %s19, 0
    %p198 = por %p196, %p197
    %p199 = scmp.le.s32.totalorder 1, %s13
    %p200 = scmp.lt.s32.totalorder %s13, 5
    %p201 = pnand %p199, %p200
    %p202 = pneg %p201
    // Predicated region
    $region9: #{_interaction_call.1} parent=5 // pred_check
      _
    $region10: #{_interaction_call.1} parent=5 // pred_check_branch
      %204 = sbr.rel (%p201) target = $region12
    $region11: #{_interaction_call.1} parent=5 // pred_region
      %s205 = ssub.s32 %s13, 1
      // Predicated region
      $region13: #{_interaction_call.1} parent=11 // pred_check
        %p206 = pneg %p60
      $region14: #{_interaction_call.1} parent=11 // pred_check_branch
        %208 = sbr.rel (%p206) target = $region16
      $region15: #{_interaction_call.1} parent=11 // pred_region
        _
      $region16: #{_interaction_call.1} parent=11 // pred_fallthru
        _
      // Predicated region
      $region17: #{_interaction_call.1} parent=11 // pred_check
        %p209 = pneg %p81
      $region18: #{_interaction_call.1} parent=11 // pred_check_branch
        %211 = sbr.rel (%p209) target = $region20
      $region19: #{_interaction_call.1} parent=11 // pred_region
        _
      $region20: #{_interaction_call.1} parent=11 // pred_fallthru
        _
      // Predicated region
      $region21: #{_interaction_call.1} parent=11 // pred_check
        %p212 = pneg %p102
      $region22: #{_interaction_call.1} parent=11 // pred_check_branch
        %214 = sbr.rel (%p212) target = $region24
      $region23: #{_interaction_call.1} parent=11 // pred_region
        _
      $region24: #{_interaction_call.1} parent=11 // pred_fallthru
        _
      // Predicated region
      $region25: #{_interaction_call.1} parent=11 // pred_check
        %p215 = pneg %p123
      $region26: #{_interaction_call.1} parent=11 // pred_check_branch
        %217 = sbr.rel (%p215) target = $region28
      $region27: #{_interaction_call.1} parent=11 // pred_region
        _
      $region28: #{_interaction_call.1} parent=11 // pred_fallthru
        _
      // Predicated region
      $region29: #{_interaction_call.1} parent=11 // pred_check
        %p218 = pneg %p144
      $region30: #{_interaction_call.1} parent=11 // pred_check_branch
        %220 = sbr.rel (%p218) target = $region32
      $region31: #{_interaction_call.1} parent=11 // pred_region
        _
      $region32: #{_interaction_call.1} parent=11 // pred_fallthru
        _
      // Predicated region
      $region33: #{_interaction_call.1} parent=11 // pred_check
        %p221 = pneg %p165
      $region34: #{_interaction_call.1} parent=11 // pred_check_branch
        %223 = sbr.rel (%p221) target = $region36
      $region35: #{_interaction_call.1} parent=11 // pred_region
        _
      $region36: #{_interaction_call.1} parent=11 // pred_fallthru
        _
    $region12: #{_interaction_call.1} parent=5 // pred_fallthru
      _
    %p224 = scmp.lt.s32.totalorder %s13, 4
    // Predicated region
    $region37: #{_interaction_call.1} parent=5 // pred_check
      %p225 = pneg %p224
    $region38: #{_interaction_call.1} parent=5 // pred_check_branch
      %227 = sbr.rel (%p225) target = $region40
    $region39: #{_interaction_call.1} parent=5 // pred_region
      // Predicated region
      $region41: #{_interaction_call.1} parent=39 // pred_check
        %p228 = pneg %p33
      $region42: #{_interaction_call.1} parent=39 // pred_check_branch
        %230 = sbr.rel (%p228) target = $region44
      $region43: #{_interaction_call.1} parent=39 // pred_region
        %s231 = smul.u32 4, %s13
        %p232 = scmp.lt.s32.totalorder %s231, 15
        %s233 = scalar_select %p232, %s231, 15
        %s234 = smul.addr %s233, 8
        %s235 = scalar_lea.vmem %s0, %s234
        %s236 = smul.u32 4, %s13
      $region44: #{_interaction_call.1} parent=39 // pred_fallthru
        _
    $region40: #{_interaction_call.1} parent=5 // pred_fallthru
      _
    %p237 = scmp.le.s32.totalorder 1, %s13
    %p238 = scmp.lt.s32.totalorder %s13, 5
    %p239 = pnand %p237, %p238
    %p240 = pneg %p239
    // Predicated region
    $region45: #{_interaction_call.1} parent=5 // pred_check
      _
    $region46: #{_interaction_call.1} parent=5 // pred_check_branch
      %242 = sbr.rel (%p239) target = $region48
    $region47: #{_interaction_call.1} parent=5 // pred_region
      %s243 = ssub.s32 %s13, 1
      %s244 = smul.u32 4, %s18
      %p245 = scmp.lt.s32.totalorder %s244, 15
      %s246 = scalar_select %p245, %s244, 15
      %s247 = smul.addr %s246, 8
      %s248 = scalar_lea.vmem %s0, %s247
      %p249 = pneg %p39
      %p250 = pneg %p36
      %p251 = pneg %p60
      %p252 = pneg %p57
      %p253 = pneg %p81
      %p254 = pneg %p78
      %p255 = pneg %p102
      %p256 = pneg %p99
      %p257 = pneg %p123
      %p258 = pneg %p120
      %p259 = pneg %p144
      %p260 = pneg %p141
      %p261 = pneg %p165
      %p262 = pneg %p162
      %p263 = pneg %p191
      %p264 = pneg %p188
      %s265 = smul.u32 4, %s18
      %p266 = scmp.lt.s32.totalorder %s265, 15
      %s267 = scalar_select %p266, %s265, 15
      %s268 = smul.addr %s267, 8
      %s269 = scalar_lea.vmem %s7, %s268
      %s270 = smul.u32 4, %s18
      %p271 = scmp.lt.s32.totalorder %s270, 15
      %s272 = scalar_select %p271, %s270, 15
      %s273 = smul.addr %s272, 8
      %s274 = scalar_lea.vmem %s0, %s273
      %s275 = smul.u32 4, %s18
      %s276 = smul.u32 4, %s18
      %p277 = scmp.lt.s32.totalorder %s276, 15
      %s278 = scalar_select %p277, %s276, 15
      %s279 = smul.addr %s278, 8
      %s280 = scalar_lea.vmem %s7, %s279
      %s281 = smul.u32 4, %s18
      %v282 = vld [vmem:[%s274] sm:$0xff]
      %v283 = vld [vmem:[%s274 + $0x8] sm:$0xff]
      %v284 = vld [vmem:[%s274 + $0x10] sm:$0xff]
      %v285 = vld [vmem:[%s274 + $0x18] sm:$0xff]
      %v286 = vld [vmem:[%s1] sm:$0xff]
      %v287 = vld [vmem:[%s1 + $0x8] sm:$0xff]
      %v288 = vld [vmem:[%s2] sm:$0x1]
      %v289 = vperm.slane %v288, 0
      %294 = vrot.lane.b32.xlu0 %v282, 112
      %v295 = vpop.permute.xlu0 %294
      %296 = vrot.lane.b32.xlu0 %v283, 112
      %v297 = vpop.permute.xlu0 %296
      %298 = vrot.lane.b32.xlu0 %v284, 112
      %v299 = vpop.permute.xlu0 %298
      %300 = vrot.lane.b32.xlu0 %v285, 112
      %v301 = vpop.permute.xlu0 %300
      %vm302 = vcmask 130048
      %v303 = vsel %vm302, %v295, 0
      %v305 = vsel %vm302, %v297, 0
      %v307 = vsel %vm302, %v299, 0
      %v309 = vsel %vm302, %v301, 0
      %311 = vmatpush.msra.mxu0 0.0
      %312 = vmatpush.msra.mxu0 0.0
      %313 = vmatpush.msra.mxu0 0.0
      %314 = vmatpush.msra.mxu0 0.0
      %315 = vmatpush.msra.mxu0 0.0
      %316 = vmatpush.msra.mxu0 0.0
      %317 = vmatpush.msra.mxu0 0.0
      %318 = vmatpush.msra.mxu0 0.0
      %319 = vmatpush.msra.mxu0 0.0
      %320 = vmatpush.msra.mxu0 0.0
      %321 = vmatpush.msra.mxu0 0.0
      %322 = vmatpush.msra.mxu0 0.0
      %323 = vmatpush.msra.mxu0 0.0
      %324 = vmatpush.msra.mxu0 0.0
      %325 = vmatpush.msra.mxu0 %v287
      %326 = vmatpush.msra.mxu0 %v286
      %327 = vmatmul.f32.gmra.mxu0 %v303
      %v328 = vpop.f32.mrf.mxu0
      %v329 = vadd.f32 %v289, %v328
      %330 = vmatmul.f32.gmra.mxu0 %v305
      %v331 = vpop.f32.mrf.mxu0
      %v332 = vadd.f32 %v289, %v331
      %333 = vmatmul.f32.gmra.mxu0 %v307
      %v334 = vpop.f32.mrf.mxu0
      %v335 = vadd.f32 %v289, %v334
      %336 = vmatmul.f32.gmra.mxu0 %v309
      %v337 = vpop.f32.mrf.mxu0
      %v338 = vadd.f32 %v289, %v337
      %339 = vdwg.mxu0
      %v340 = vld [vmem:[%s3] sm:$0x1]
      %v341 = vld [vmem:[%s4] sm:$0x1]
      %vm342 = vcmask 261120
      %v343 = vsel %vm342, %v329, 0.0
      %344 = vadd.xlane.f32.xlu0 %v343
      %v345 = vpop.xlane.xlu0 %344
      %v346 = vsel %vm342, %v332, 0.0
      %347 = vadd.xlane.f32.xlu0 %v346
      %v348 = vpop.xlane.xlu0 %347
      %v349 = vsel %vm342, %v335, 0.0
      %350 = vadd.xlane.f32.xlu0 %v349
      %v351 = vpop.xlane.xlu0 %350
      %v352 = vsel %vm342, %v338, 0.0
      %353 = vadd.xlane.f32.xlu0 %v352
      %v354 = vpop.xlane.xlu0 %353
      %v355 = vrcp.pop 32.0
      %v356 = vmul.f32 32.0, %v355
      %v357 = vsub.f32 1.0, %v356
      %v358 = vmul.f32 %v355, %v357
      %v359 = vadd.f32 %v355, %v358
      %vm360 = vweird.f32 %v355
      %v361 = vsel %vm360, %v355, %v359
      %v362 = vmul.f32 %v345, %v361
      %v363 = vmul.f32 %v348, %v361
      %v364 = vmul.f32 %v351, %v361
      %v365 = vmul.f32 %v354, %v361
      %v366 = vsub.f32 %v329, %v362
      %v367 = vsub.f32 %v332, %v363
      %v368 = vsub.f32 %v335, %v364
      %v369 = vsub.f32 %v338, %v365
      %v370 = vmul.f32 %v366, %v366
      %v371 = vmul.f32 %v367, %v367
      %v372 = vmul.f32 %v368, %v368
      %v373 = vmul.f32 %v369, %v369
      %v374 = vsel %vm342, %v370, 0.0
      %375 = vadd.xlane.f32.xlu0 %v374
      %v376 = vpop.xlane.xlu0 %375
      %v377 = vsel %vm342, %v371, 0.0
      %378 = vadd.xlane.f32.xlu0 %v377
      %v379 = vpop.xlane.xlu0 %378
      %v380 = vsel %vm342, %v372, 0.0
      %381 = vadd.xlane.f32.xlu0 %v380
      %v382 = vpop.xlane.xlu0 %381
      %v383 = vsel %vm342, %v373, 0.0
      %384 = vadd.xlane.f32.xlu0 %v383
      %v385 = vpop.xlane.xlu0 %384
      %v386 = vmul.f32 %v376, %v361
      %v387 = vmul.f32 %v379, %v361
      %v388 = vmul.f32 %v382, %v361
      %v389 = vmul.f32 %v385, %v361
      %v390 = vadd.f32 %v386, 1e-05
      %v391 = vadd.f32 %v387, 1e-05
      %v392 = vadd.f32 %v388, 1e-05
      %v393 = vadd.f32 %v389, 1e-05
      %v394 = vrsqrt.pop %v390
      %v395 = vmul.f32 %v394, %v390
      %v396 = vmul.f32 %v395, %v394
      %v397 = vmul.f32 0.5, %v396
      %v398 = vsub.f32 1.5, %v397
      %v399 = vmul.f32 %v394, %v398
      %vm400 = vweird.f32 %v390
      %vm401 = vweird.f32 %v394
      %vm402 = vmor %vm400, %vm401
      %v403 = vsel %vm402, %v394, %v399
      %v404 = vrsqrt.pop %v391
      %v405 = vmul.f32 %v404, %v391
      %v406 = vmul.f32 %v405, %v404
      %v407 = vmul.f32 0.5, %v406
      %v408 = vsub.f32 1.5, %v407
      %v409 = vmul.f32 %v404, %v408
      %vm410 = vweird.f32 %v391
      %vm411 = vweird.f32 %v404
      %vm412 = vmor %vm410, %vm411
      %v413 = vsel %vm412, %v404, %v409
      %v414 = vrsqrt.pop %v392
      %v415 = vmul.f32 %v414, %v392
      %v416 = vmul.f32 %v415, %v414
      %v417 = vmul.f32 0.5, %v416
      %v418 = vsub.f32 1.5, %v417
      %v419 = vmul.f32 %v414, %v418
      %vm420 = vweird.f32 %v392
      %vm421 = vweird.f32 %v414
      %vm422 = vmor %vm420, %vm421
      %v423 = vsel %vm422, %v414, %v419
      %v424 = vrsqrt.pop %v393
      %v425 = vmul.f32 %v424, %v393
      %v426 = vmul.f32 %v425, %v424
      %v427 = vmul.f32 0.5, %v426
      %v428 = vsub.f32 1.5, %v427
      %v429 = vmul.f32 %v424, %v428
      %vm430 = vweird.f32 %v393
      %vm431 = vweird.f32 %v424
      %vm432 = vmor %vm430, %vm431
      %v433 = vsel %vm432, %v424, %v429
      %v434 = vmul.f32 %v366, %v403
      %v435 = vmul.f32 %v367, %v413
      %v436 = vmul.f32 %v368, %v423
      %v437 = vmul.f32 %v369, %v433
      %v438 = vperm.slane %v340, 0
      %v439 = vmul.f32 %v434, %v438
      %v440 = vmul.f32 %v435, %v438
      %v441 = vmul.f32 %v436, %v438
      %v442 = vmul.f32 %v437, %v438
      %v443 = vperm.slane %v341, 0
      %v444 = vadd.f32 %v439, %v443
      %v445 = vadd.f32 %v440, %v443
      %v446 = vadd.f32 %v441, %v443
      %v447 = vadd.f32 %v442, %v443
      %v448 = vmax.f32 %v444, 0.0
      %v449 = vmax.f32 %v445, 0.0
      %v450 = vmax.f32 %v446, 0.0
      %v451 = vmax.f32 %v447, 0.0
      %v452 = vld [vmem:[%s3 + $0x1] sm:$0x1]
      %v453 = vld [vmem:[%s4 + $0x1] sm:$0x1]
      %458 = vrot.lane.b32.xlu0 %v329, 96
      %v459 = vpop.permute.xlu0 %458
      %460 = vrot.lane.b32.xlu0 %v332, 96
      %v461 = vpop.permute.xlu0 %460
      %462 = vrot.lane.b32.xlu0 %v335, 96
      %v463 = vpop.permute.xlu0 %462
      %464 = vrot.lane.b32.xlu0 %v338, 96
      %v465 = vpop.permute.xlu0 %464
      %v470 = vsel %vm342, %v459, 0.0
      %471 = vadd.xlane.f32.xlu0 %v470
      %v472 = vpop.xlane.xlu0 %471
      %v473 = vsel %vm342, %v461, 0.0
      %474 = vadd.xlane.f32.xlu0 %v473
      %v475 = vpop.xlane.xlu0 %474
      %v476 = vsel %vm342, %v463, 0.0
      %477 = vadd.xlane.f32.xlu0 %v476
      %v478 = vpop.xlane.xlu0 %477
      %v479 = vsel %vm342, %v465, 0.0
      %480 = vadd.xlane.f32.xlu0 %v479
      %v481 = vpop.xlane.xlu0 %480
      %v482 = vmul.f32 %v472, %v361
      %v483 = vmul.f32 %v475, %v361
      %v484 = vmul.f32 %v478, %v361
      %v485 = vmul.f32 %v481, %v361
      %v486 = vsub.f32 %v329, %v482
      %v487 = vsub.f32 %v332, %v483
      %v488 = vsub.f32 %v335, %v484
      %v489 = vsub.f32 %v338, %v485
      %v490 = vmul.f32 %v486, %v486
      %v491 = vmul.f32 %v487, %v487
      %v492 = vmul.f32 %v488, %v488
      %v493 = vmul.f32 %v489, %v489
      %498 = vrot.lane.b32.xlu0 %v490, 96
      %v499 = vpop.permute.xlu0 %498
      %500 = vrot.lane.b32.xlu0 %v491, 96
      %v501 = vpop.permute.xlu0 %500
      %502 = vrot.lane.b32.xlu0 %v492, 96
      %v503 = vpop.permute.xlu0 %502
      %504 = vrot.lane.b32.xlu0 %v493, 96
      %v505 = vpop.permute.xlu0 %504
      %v510 = vsel %vm342, %v499, 0.0
      %511 = vadd.xlane.f32.xlu0 %v510
      %v512 = vpop.xlane.xlu0 %511
      %v513 = vsel %vm342, %v501, 0.0
      %514 = vadd.xlane.f32.xlu0 %v513
      %v515 = vpop.xlane.xlu0 %514
      %v516 = vsel %vm342, %v503, 0.0
      %517 = vadd.xlane.f32.xlu0 %v516
      %v518 = vpop.xlane.xlu0 %517
      %v519 = vsel %vm342, %v505, 0.0
      %520 = vadd.xlane.f32.xlu0 %v519
      %v521 = vpop.xlane.xlu0 %520
      %v522 = vmul.f32 %v512, %v361
      %v523 = vmul.f32 %v515, %v361
      %v524 = vmul.f32 %v518, %v361
      %v525 = vmul.f32 %v521, %v361
      %v526 = vadd.f32 %v522, 1e-05
      %v527 = vadd.f32 %v523, 1e-05
      %v528 = vadd.f32 %v524, 1e-05
      %v529 = vadd.f32 %v525, 1e-05
      %v530 = vrsqrt.pop %v526
      %v531 = vmul.f32 %v530, %v526
      %v532 = vmul.f32 %v531, %v530
      %v533 = vmul.f32 0.5, %v532
      %v534 = vsub.f32 1.5, %v533
      %v535 = vmul.f32 %v530, %v534
      %vm536 = vweird.f32 %v526
      %vm537 = vweird.f32 %v530
      %vm538 = vmor %vm536, %vm537
      %v539 = vsel %vm538, %v530, %v535
      %v540 = vrsqrt.pop %v527
      %v541 = vmul.f32 %v540, %v527
      %v542 = vmul.f32 %v541, %v540
      %v543 = vmul.f32 0.5, %v542
      %v544 = vsub.f32 1.5, %v543
      %v545 = vmul.f32 %v540, %v544
      %vm546 = vweird.f32 %v527
      %vm547 = vweird.f32 %v540
      %vm548 = vmor %vm546, %vm547
      %v549 = vsel %vm548, %v540, %v545
      %v550 = vrsqrt.pop %v528
      %v551 = vmul.f32 %v550, %v528
      %v552 = vmul.f32 %v551, %v550
      %v553 = vmul.f32 0.5, %v552
      %v554 = vsub.f32 1.5, %v553
      %v555 = vmul.f32 %v550, %v554
      %vm556 = vweird.f32 %v528
      %vm557 = vweird.f32 %v550
      %vm558 = vmor %vm556, %vm557
      %v559 = vsel %vm558, %v550, %v555
      %v560 = vrsqrt.pop %v529
      %v561 = vmul.f32 %v560, %v529
      %v562 = vmul.f32 %v561, %v560
      %v563 = vmul.f32 0.5, %v562
      %v564 = vsub.f32 1.5, %v563
      %v565 = vmul.f32 %v560, %v564
      %vm566 = vweird.f32 %v529
      %vm567 = vweird.f32 %v560
      %vm568 = vmor %vm566, %vm567
      %v569 = vsel %vm568, %v560, %v565
      %v570 = vmul.f32 %v486, %v539
      %v571 = vmul.f32 %v487, %v549
      %v572 = vmul.f32 %v488, %v559
      %v573 = vmul.f32 %v489, %v569
      %v574 = vperm.slane %v452, 0
      %576 = vrot.lane.b32.xlu0 %v574, 32
      %v577 = vpop.permute.xlu0 %576
      %v579 = vmul.f32 %v570, %v577
      %v580 = vmul.f32 %v571, %v577
      %v581 = vmul.f32 %v572, %v577
      %v582 = vmul.f32 %v573, %v577
      %v583 = vperm.slane %v453, 0
      %585 = vrot.lane.b32.xlu0 %v583, 32
      %v586 = vpop.permute.xlu0 %585
      %v588 = vadd.f32 %v579, %v586
      %v589 = vadd.f32 %v580, %v586
      %v590 = vadd.f32 %v581, %v586
      %v591 = vadd.f32 %v582, %v586
      %v592 = vmax.f32 %v588, 0.0
      %v593 = vmax.f32 %v589, 0.0
      %v594 = vmax.f32 %v590, 0.0
      %v595 = vmax.f32 %v591, 0.0
      %v596 = vld [vmem:[%s5] sm:$0xff]
      %v597 = vld [vmem:[%s5 + $0x8] sm:$0xff]
      %v598 = vld [vmem:[%s5 + $0x10] sm:$0xff]
      %v599 = vld [vmem:[%s5 + $0x18] sm:$0xff]
      %v600 = vld [vmem:[%s6] sm:$0x1]
      %v601 = vperm.slane %v600, 0
      %v603 = vsel %vm342, %v448, 0
      %v606 = vsel %vm342, %v449, 0
      %v609 = vsel %vm342, %v450, 0
      %v612 = vsel %vm342, %v451, 0
      %614 = vmatpush.msra.mxu0 0.0
      %615 = vmatpush.msra.mxu0 0.0
      %616 = vmatpush.msra.mxu0 0.0
      %617 = vmatpush.msra.mxu0 0.0
      %618 = vmatpush.msra.mxu0 0.0
      %619 = vmatpush.msra.mxu0 0.0
      %620 = vmatpush.msra.mxu0 0.0
      %621 = vmatpush.msra.mxu0 0.0
      %622 = vmatpush.msra.mxu0 0.0
      %623 = vmatpush.msra.mxu0 0.0
      %624 = vmatpush.msra.mxu0 0.0
      %625 = vmatpush.msra.mxu0 0.0
      %626 = vmatpush.msra.mxu0 %v599
      %627 = vmatpush.msra.mxu0 %v598
      %628 = vmatpush.msra.mxu0 %v597
      %629 = vmatpush.msra.mxu0 %v596
      %630 = vmatmul.f32.gmra.mxu0 %v603
      %v631 = vpop.f32.mrf.mxu0
      %v632 = vadd.f32 %v601, %v631
      %633 = vmatmul.f32.gmra.mxu0 %v606
      %v634 = vpop.f32.mrf.mxu0
      %v635 = vadd.f32 %v601, %v634
      %636 = vmatmul.f32.gmra.mxu0 %v609
      %v637 = vpop.f32.mrf.mxu0
      %v638 = vadd.f32 %v601, %v637
      %639 = vmatmul.f32.gmra.mxu0 %v612
      %v640 = vpop.f32.mrf.mxu0
      %v641 = vadd.f32 %v601, %v640
      %642 = vdwg.mxu0
      %s643 = scalar_lea.vmem %s5, 32
      %v644 = vld [vmem:[%s643] sm:$0xff]
      %v645 = vld [vmem:[%s643 + $0x8] sm:$0xff]
      %v646 = vld [vmem:[%s643 + $0x10] sm:$0xff]
      %v647 = vld [vmem:[%s643 + $0x18] sm:$0xff]
      %652 = vrot.lane.b32.xlu0 %v592, 96
      %v653 = vpop.permute.xlu0 %652
      %654 = vrot.lane.b32.xlu0 %v593, 96
      %v655 = vpop.permute.xlu0 %654
      %656 = vrot.lane.b32.xlu0 %v594, 96
      %v657 = vpop.permute.xlu0 %656
      %658 = vrot.lane.b32.xlu0 %v595, 96
      %v659 = vpop.permute.xlu0 %658
      %661 = vrot.lane.b32.xlu0 %v601, 112
      %v662 = vpop.permute.xlu0 %661
      %v664 = vsel %vm342, %v653, 0
      %v666 = vsel %vm342, %v655, 0
      %v668 = vsel %vm342, %v657, 0
      %v670 = vsel %vm342, %v659, 0
      %672 = vmatpush.msra.mxu0 0.0
      %673 = vmatpush.msra.mxu0 0.0
      %674 = vmatpush.msra.mxu0 0.0
      %675 = vmatpush.msra.mxu0 0.0
      %676 = vmatpush.msra.mxu0 0.0
      %677 = vmatpush.msra.mxu0 0.0
      %678 = vmatpush.msra.mxu0 0.0
      %679 = vmatpush.msra.mxu0 0.0
      %680 = vmatpush.msra.mxu0 0.0
      %681 = vmatpush.msra.mxu0 0.0
      %682 = vmatpush.msra.mxu0 0.0
      %683 = vmatpush.msra.mxu0 0.0
      %684 = vmatpush.msra.mxu0 %v647
      %685 = vmatpush.msra.mxu0 %v646
      %686 = vmatpush.msra.mxu0 %v645
      %687 = vmatpush.msra.mxu0 %v644
      %688 = vmatmul.f32.gmra.mxu0 %v664
      %v689 = vpop.f32.mrf.mxu0
      %v690 = vadd.f32 %v662, %v689
      %691 = vmatmul.f32.gmra.mxu0 %v666
      %v692 = vpop.f32.mrf.mxu0
      %v693 = vadd.f32 %v662, %v692
      %694 = vmatmul.f32.gmra.mxu0 %v668
      %v695 = vpop.f32.mrf.mxu0
      %v696 = vadd.f32 %v662, %v695
      %697 = vmatmul.f32.gmra.mxu0 %v670
      %v698 = vpop.f32.mrf.mxu0
      %v699 = vadd.f32 %v662, %v698
      %700 = vdwg.mxu0
      %v701 = vmax.f32 %v632, -5.0
      %v702 = vmax.f32 %v635, -5.0
      %v703 = vmax.f32 %v638, -5.0
      %v704 = vmax.f32 %v641, -5.0
      %v705 = vmin.f32 %v701, 5.0
      %v706 = vmin.f32 %v702, 5.0
      %v707 = vmin.f32 %v703, 5.0
      %v708 = vmin.f32 %v704, 5.0
      %v709 = vmul.f32 %v705, 1.442695
      %v710 = vpow.pop %v709
      %v711 = vmul.f32 %v706, 1.442695
      %v712 = vpow.pop %v711
      %v713 = vmul.f32 %v707, 1.442695
      %v714 = vpow.pop %v713
      %v715 = vmul.f32 %v708, 1.442695
      %v716 = vpow.pop %v715
      %v717 = vmul.f32 %v282, %v710
      %v718 = vmul.f32 %v283, %v712
      %v719 = vmul.f32 %v284, %v714
      %v720 = vmul.f32 %v285, %v716
      %v721 = vadd.f32 %v717, %v690
      %v722 = vadd.f32 %v718, %v693
      %v723 = vadd.f32 %v719, %v696
      %v724 = vadd.f32 %v720, %v699
      %s725 = scalar_lea.vmem %s1, 16
      %v726 = vld [vmem:[%s725] sm:$0xff]
      %v727 = vld [vmem:[%s725 + $0x8] sm:$0xff]
      %v728 = vld [vmem:[%s2 + $0x1] sm:$0x1]
      %v729 = vperm.slane %v728, 0
      %v731 = vsel %vm302, %v721, 0
      %v734 = vsel %vm302, %v722, 0
      %v737 = vsel %vm302, %v723, 0
      %v740 = vsel %vm302, %v724, 0
      %742 = vmatpush.msra.mxu0 0.0
      %743 = vmatpush.msra.mxu0 0.0
      %744 = vmatpush.msra.mxu0 0.0
      %745 = vmatpush.msra.mxu0 0.0
      %746 = vmatpush.msra.mxu0 0.0
      %747 = vmatpush.msra.mxu0 0.0
      %748 = vmatpush.msra.mxu0 0.0
      %749 = vmatpush.msra.mxu0 0.0
      %750 = vmatpush.msra.mxu0 0.0
      %751 = vmatpush.msra.mxu0 0.0
      %752 = vmatpush.msra.mxu0 0.0
      %753 = vmatpush.msra.mxu0 0.0
      %754 = vmatpush.msra.mxu0 0.0
      %755 = vmatpush.msra.mxu0 0.0
      %756 = vmatpush.msra.mxu0 %v727
      %757 = vmatpush.msra.mxu0 %v726
      %758 = vmatmul.f32.gmra.mxu0 %v731
      %v759 = vpop.f32.mrf.mxu0
      %v760 = vadd.f32 %v729, %v759
      %761 = vmatmul.f32.gmra.mxu0 %v734
      %v762 = vpop.f32.mrf.mxu0
      %v763 = vadd.f32 %v729, %v762
      %764 = vmatmul.f32.gmra.mxu0 %v737
      %v765 = vpop.f32.mrf.mxu0
      %v766 = vadd.f32 %v729, %v765
      %767 = vmatmul.f32.gmra.mxu0 %v740
      %v768 = vpop.f32.mrf.mxu0
      %v769 = vadd.f32 %v729, %v768
      %770 = vdwg.mxu0
      %v771 = vld [vmem:[%s3 + $0x2] sm:$0x1]
      %v772 = vld [vmem:[%s4 + $0x2] sm:$0x1]
      %v773 = vsel %vm342, %v760, 0.0
      %774 = vadd.xlane.f32.xlu0 %v773
      %v775 = vpop.xlane.xlu0 %774
      %v776 = vsel %vm342, %v763, 0.0
      %777 = vadd.xlane.f32.xlu0 %v776
      %v778 = vpop.xlane.xlu0 %777
      %v779 = vsel %vm342, %v766, 0.0
      %780 = vadd.xlane.f32.xlu0 %v779
      %v781 = vpop.xlane.xlu0 %780
      %v782 = vsel %vm342, %v769, 0.0
      %783 = vadd.xlane.f32.xlu0 %v782
      %v784 = vpop.xlane.xlu0 %783
      %v785 = vmul.f32 %v775, %v361
      %v786 = vmul.f32 %v778, %v361
      %v787 = vmul.f32 %v781, %v361
      %v788 = vmul.f32 %v784, %v361
      %v789 = vsub.f32 %v760, %v785
      %v790 = vsub.f32 %v763, %v786
      %v791 = vsub.f32 %v766, %v787
      %v792 = vsub.f32 %v769, %v788
      %v793 = vmul.f32 %v789, %v789
      %v794 = vmul.f32 %v790, %v790
      %v795 = vmul.f32 %v791, %v791
      %v796 = vmul.f32 %v792, %v792
      %v797 = vsel %vm342, %v793, 0.0
      %798 = vadd.xlane.f32.xlu0 %v797
      %v799 = vpop.xlane.xlu0 %798
      %v800 = vsel %vm342, %v794, 0.0
      %801 = vadd.xlane.f32.xlu0 %v800
      %v802 = vpop.xlane.xlu0 %801
      %v803 = vsel %vm342, %v795, 0.0
      %804 = vadd.xlane.f32.xlu0 %v803
      %v805 = vpop.xlane.xlu0 %804
      %v806 = vsel %vm342, %v796, 0.0
      %807 = vadd.xlane.f32.xlu0 %v806
      %v808 = vpop.xlane.xlu0 %807
      %v809 = vmul.f32 %v799, %v361
      %v810 = vmul.f32 %v802, %v361
      %v811 = vmul.f32 %v805, %v361
      %v812 = vmul.f32 %v808, %v361
      %v813 = vadd.f32 %v809, 1e-05
      %v814 = vadd.f32 %v810, 1e-05
      %v815 = vadd.f32 %v811, 1e-05
      %v816 = vadd.f32 %v812, 1e-05
      %v817 = vrsqrt.pop %v813
      %v818 = vmul.f32 %v817, %v813
      %v819 = vmul.f32 %v818, %v817
      %v820 = vmul.f32 0.5, %v819
      %v821 = vsub.f32 1.5, %v820
      %v822 = vmul.f32 %v817, %v821
      %vm823 = vweird.f32 %v813
      %vm824 = vweird.f32 %v817
      %vm825 = vmor %vm823, %vm824
      %v826 = vsel %vm825, %v817, %v822
      %v827 = vrsqrt.pop %v814
      %v828 = vmul.f32 %v827, %v814
      %v829 = vmul.f32 %v828, %v827
      %v830 = vmul.f32 0.5, %v829
      %v831 = vsub.f32 1.5, %v830
      %v832 = vmul.f32 %v827, %v831
      %vm833 = vweird.f32 %v814
      %vm834 = vweird.f32 %v827
      %vm835 = vmor %vm833, %vm834
      %v836 = vsel %vm835, %v827, %v832
      %v837 = vrsqrt.pop %v815
      %v838 = vmul.f32 %v837, %v815
      %v839 = vmul.f32 %v838, %v837
      %v840 = vmul.f32 0.5, %v839
      %v841 = vsub.f32 1.5, %v840
      %v842 = vmul.f32 %v837, %v841
      %vm843 = vweird.f32 %v815
      %vm844 = vweird.f32 %v837
      %vm845 = vmor %vm843, %vm844
      %v846 = vsel %vm845, %v837, %v842
      %v847 = vrsqrt.pop %v816
      %v848 = vmul.f32 %v847, %v816
      %v849 = vmul.f32 %v848, %v847
      %v850 = vmul.f32 0.5, %v849
      %v851 = vsub.f32 1.5, %v850
      %v852 = vmul.f32 %v847, %v851
      %vm853 = vweird.f32 %v816
      %vm854 = vweird.f32 %v847
      %vm855 = vmor %vm853, %vm854
      %v856 = vsel %vm855, %v847, %v852
      %v857 = vmul.f32 %v789, %v826
      %v858 = vmul.f32 %v790, %v836
      %v859 = vmul.f32 %v791, %v846
      %v860 = vmul.f32 %v792, %v856
      %v861 = vperm.slane %v771, 0
      %v862 = vmul.f32 %v857, %v861
      %v863 = vmul.f32 %v858, %v861
      %v864 = vmul.f32 %v859, %v861
      %v865 = vmul.f32 %v860, %v861
      %v866 = vperm.slane %v772, 0
      %v867 = vadd.f32 %v862, %v866
      %v868 = vadd.f32 %v863, %v866
      %v869 = vadd.f32 %v864, %v866
      %v870 = vadd.f32 %v865, %v866
      %v871 = vmax.f32 %v867, 0.0
      %v872 = vmax.f32 %v868, 0.0
      %v873 = vmax.f32 %v869, 0.0
      %v874 = vmax.f32 %v870, 0.0
      %v875 = vld [vmem:[%s3 + $0x3] sm:$0x1]
      %v876 = vld [vmem:[%s4 + $0x3] sm:$0x1]
      %881 = vrot.lane.b32.xlu0 %v760, 96
      %v882 = vpop.permute.xlu0 %881
      %883 = vrot.lane.b32.xlu0 %v763, 96
      %v884 = vpop.permute.xlu0 %883
      %885 = vrot.lane.b32.xlu0 %v766, 96
      %v886 = vpop.permute.xlu0 %885
      %887 = vrot.lane.b32.xlu0 %v769, 96
      %v888 = vpop.permute.xlu0 %887
      %v893 = vsel %vm342, %v882, 0.0
      %894 = vadd.xlane.f32.xlu0 %v893
      %v895 = vpop.xlane.xlu0 %894
      %v896 = vsel %vm342, %v884, 0.0
      %897 = vadd.xlane.f32.xlu0 %v896
      %v898 = vpop.xlane.xlu0 %897
      %v899 = vsel %vm342, %v886, 0.0
      %900 = vadd.xlane.f32.xlu0 %v899
      %v901 = vpop.xlane.xlu0 %900
      %v902 = vsel %vm342, %v888, 0.0
      %903 = vadd.xlane.f32.xlu0 %v902
      %v904 = vpop.xlane.xlu0 %903
      %v905 = vmul.f32 %v895, %v361
      %v906 = vmul.f32 %v898, %v361
      %v907 = vmul.f32 %v901, %v361
      %v908 = vmul.f32 %v904, %v361
      %v909 = vsub.f32 %v760, %v905
      %v910 = vsub.f32 %v763, %v906
      %v911 = vsub.f32 %v766, %v907
      %v912 = vsub.f32 %v769, %v908
      %v913 = vmul.f32 %v909, %v909
      %v914 = vmul.f32 %v910, %v910
      %v915 = vmul.f32 %v911, %v911
      %v916 = vmul.f32 %v912, %v912
      %921 = vrot.lane.b32.xlu0 %v913, 96
      %v922 = vpop.permute.xlu0 %921
      %923 = vrot.lane.b32.xlu0 %v914, 96
      %v924 = vpop.permute.xlu0 %923
      %925 = vrot.lane.b32.xlu0 %v915, 96
      %v926 = vpop.permute.xlu0 %925
      %927 = vrot.lane.b32.xlu0 %v916, 96
      %v928 = vpop.permute.xlu0 %927
      %v933 = vsel %vm342, %v922, 0.0
      %934 = vadd.xlane.f32.xlu0 %v933
      %v935 = vpop.xlane.xlu0 %934
      %v936 = vsel %vm342, %v924, 0.0
      %937 = vadd.xlane.f32.xlu0 %v936
      %v938 = vpop.xlane.xlu0 %937
      %v939 = vsel %vm342, %v926, 0.0
      %940 = vadd.xlane.f32.xlu0 %v939
      %v941 = vpop.xlane.xlu0 %940
      %v942 = vsel %vm342, %v928, 0.0
      %943 = vadd.xlane.f32.xlu0 %v942
      %v944 = vpop.xlane.xlu0 %943
      %v945 = vmul.f32 %v935, %v361
      %v946 = vmul.f32 %v938, %v361
      %v947 = vmul.f32 %v941, %v361
      %v948 = vmul.f32 %v944, %v361
      %v949 = vadd.f32 %v945, 1e-05
      %v950 = vadd.f32 %v946, 1e-05
      %v951 = vadd.f32 %v947, 1e-05
      %v952 = vadd.f32 %v948, 1e-05
      %v953 = vrsqrt.pop %v949
      %v954 = vmul.f32 %v953, %v949
      %v955 = vmul.f32 %v954, %v953
      %v956 = vmul.f32 0.5, %v955
      %v957 = vsub.f32 1.5, %v956
      %v958 = vmul.f32 %v953, %v957
      %vm959 = vweird.f32 %v949
      %vm960 = vweird.f32 %v953
      %vm961 = vmor %vm959, %vm960
      %v962 = vsel %vm961, %v953, %v958
      %v963 = vrsqrt.pop %v950
      %v964 = vmul.f32 %v963, %v950
      %v965 = vmul.f32 %v964, %v963
      %v966 = vmul.f32 0.5, %v965
      %v967 = vsub.f32 1.5, %v966
      %v968 = vmul.f32 %v963, %v967
      %vm969 = vweird.f32 %v950
      %vm970 = vweird.f32 %v963
      %vm971 = vmor %vm969, %vm970
      %v972 = vsel %vm971, %v963, %v968
      %v973 = vrsqrt.pop %v951
      %v974 = vmul.f32 %v973, %v951
      %v975 = vmul.f32 %v974, %v973
      %v976 = vmul.f32 0.5, %v975
      %v977 = vsub.f32 1.5, %v976
      %v978 = vmul.f32 %v973, %v977
      %vm979 = vweird.f32 %v951
      %vm980 = vweird.f32 %v973
      %vm981 = vmor %vm979, %vm980
      %v982 = vsel %vm981, %v973, %v978
      %v983 = vrsqrt.pop %v952
      %v984 = vmul.f32 %v983, %v952
      %v985 = vmul.f32 %v984, %v983
      %v986 = vmul.f32 0.5, %v985
      %v987 = vsub.f32 1.5, %v986
      %v988 = vmul.f32 %v983, %v987
      %vm989 = vweird.f32 %v952
      %vm990 = vweird.f32 %v983
      %vm991 = vmor %vm989, %vm990
      %v992 = vsel %vm991, %v983, %v988
      %v993 = vmul.f32 %v909, %v962
      %v994 = vmul.f32 %v910, %v972
      %v995 = vmul.f32 %v911, %v982
      %v996 = vmul.f32 %v912, %v992
      %v997 = vperm.slane %v875, 0
      %999 = vrot.lane.b32.xlu0 %v997, 32
      %v1000 = vpop.permute.xlu0 %999
      %v1002 = vmul.f32 %v993, %v1000
      %v1003 = vmul.f32 %v994, %v1000
      %v1004 = vmul.f32 %v995, %v1000
      %v1005 = vmul.f32 %v996, %v1000
      %v1006 = vperm.slane %v876, 0
      %1008 = vrot.lane.b32.xlu0 %v1006, 32
      %v1009 = vpop.permute.xlu0 %1008
      %v1011 = vadd.f32 %v1002, %v1009
      %v1012 = vadd.f32 %v1003, %v1009
      %v1013 = vadd.f32 %v1004, %v1009
      %v1014 = vadd.f32 %v1005, %v1009
      %v1015 = vmax.f32 %v1011, 0.0
      %v1016 = vmax.f32 %v1012, 0.0
      %v1017 = vmax.f32 %v1013, 0.0
      %v1018 = vmax.f32 %v1014, 0.0
      %s1019 = scalar_lea.vmem %s5, 64
      %v1020 = vld [vmem:[%s1019] sm:$0xff]
      %v1021 = vld [vmem:[%s1019 + $0x8] sm:$0xff]
      %v1022 = vld [vmem:[%s1019 + $0x10] sm:$0xff]
      %v1023 = vld [vmem:[%s1019 + $0x18] sm:$0xff]
      %v1024 = vld [vmem:[%s6 + $0x1] sm:$0x1]
      %v1025 = vperm.slane %v1024, 0
      %v1027 = vsel %vm342, %v871, 0
      %v1030 = vsel %vm342, %v872, 0
      %v1033 = vsel %vm342, %v873, 0
      %v1036 = vsel %vm342, %v874, 0
      %1038 = vmatpush.msra.mxu0 0.0
      %1039 = vmatpush.msra.mxu0 0.0
      %1040 = vmatpush.msra.mxu0 0.0
      %1041 = vmatpush.msra.mxu0 0.0
      %1042 = vmatpush.msra.mxu0 0.0
      %1043 = vmatpush.msra.mxu0 0.0
      %1044 = vmatpush.msra.mxu0 0.0
      %1045 = vmatpush.msra.mxu0 0.0
      %1046 = vmatpush.msra.mxu0 0.0
      %1047 = vmatpush.msra.mxu0 0.0
      %1048 = vmatpush.msra.mxu0 0.0
      %1049 = vmatpush.msra.mxu0 0.0
      %1050 = vmatpush.msra.mxu0 %v1023
      %1051 = vmatpush.msra.mxu0 %v1022
      %1052 = vmatpush.msra.mxu0 %v1021
      %1053 = vmatpush.msra.mxu0 %v1020
      %1054 = vmatmul.f32.gmra.mxu0 %v1027
      %v1055 = vpop.f32.mrf.mxu0
      %v1056 = vadd.f32 %v1025, %v1055
      %1057 = vmatmul.f32.gmra.mxu0 %v1030
      %v1058 = vpop.f32.mrf.mxu0
      %v1059 = vadd.f32 %v1025, %v1058
      %1060 = vmatmul.f32.gmra.mxu0 %v1033
      %v1061 = vpop.f32.mrf.mxu0
      %v1062 = vadd.f32 %v1025, %v1061
      %1063 = vmatmul.f32.gmra.mxu0 %v1036
      %v1064 = vpop.f32.mrf.mxu0
      %v1065 = vadd.f32 %v1025, %v1064
      %1066 = vdwg.mxu0
      %s1067 = scalar_lea.vmem %s5, 96
      %v1068 = vld [vmem:[%s1067] sm:$0xff]
      %v1069 = vld [vmem:[%s1067 + $0x8] sm:$0xff]
      %v1070 = vld [vmem:[%s1067 + $0x10] sm:$0xff]
      %v1071 = vld [vmem:[%s1067 + $0x18] sm:$0xff]
      %1076 = vrot.lane.b32.xlu0 %v1015, 96
      %v1077 = vpop.permute.xlu0 %1076
      %1078 = vrot.lane.b32.xlu0 %v1016, 96
      %v1079 = vpop.permute.xlu0 %1078
      %1080 = vrot.lane.b32.xlu0 %v1017, 96
      %v1081 = vpop.permute.xlu0 %1080
      %1082 = vrot.lane.b32.xlu0 %v1018, 96
      %v1083 = vpop.permute.xlu0 %1082
      %1085 = vrot.lane.b32.xlu0 %v1025, 112
      %v1086 = vpop.permute.xlu0 %1085
      %v1088 = vsel %vm342, %v1077, 0
      %v1090 = vsel %vm342, %v1079, 0
      %v1092 = vsel %vm342, %v1081, 0
      %v1094 = vsel %vm342, %v1083, 0
      %1096 = vmatpush.msra.mxu0 0.0
      %1097 = vmatpush.msra.mxu0 0.0
      %1098 = vmatpush.msra.mxu0 0.0
      %1099 = vmatpush.msra.mxu0 0.0
      %1100 = vmatpush.msra.mxu0 0.0
      %1101 = vmatpush.msra.mxu0 0.0
      %1102 = vmatpush.msra.mxu0 0.0
      %1103 = vmatpush.msra.mxu0 0.0
      %1104 = vmatpush.msra.mxu0 0.0
      %1105 = vmatpush.msra.mxu0 0.0
      %1106 = vmatpush.msra.mxu0 0.0
      %1107 = vmatpush.msra.mxu0 0.0
      %1108 = vmatpush.msra.mxu0 %v1071
      %1109 = vmatpush.msra.mxu0 %v1070
      %1110 = vmatpush.msra.mxu0 %v1069
      %1111 = vmatpush.msra.mxu0 %v1068
      %1112 = vmatmul.f32.gmra.mxu0 %v1088
      %v1113 = vpop.f32.mrf.mxu0
      %v1114 = vadd.f32 %v1086, %v1113
      %1115 = vmatmul.f32.gmra.mxu0 %v1090
      %v1116 = vpop.f32.mrf.mxu0
      %v1117 = vadd.f32 %v1086, %v1116
      %1118 = vmatmul.f32.gmra.mxu0 %v1092
      %v1119 = vpop.f32.mrf.mxu0
      %v1120 = vadd.f32 %v1086, %v1119
      %1121 = vmatmul.f32.gmra.mxu0 %v1094
      %v1122 = vpop.f32.mrf.mxu0
      %v1123 = vadd.f32 %v1086, %v1122
      %1124 = vdwg.mxu0
      %v1125 = vmax.f32 %v1056, -5.0
      %v1126 = vmax.f32 %v1059, -5.0
      %v1127 = vmax.f32 %v1062, -5.0
      %v1128 = vmax.f32 %v1065, -5.0
      %v1129 = vmin.f32 %v1125, 5.0
      %v1130 = vmin.f32 %v1126, 5.0
      %v1131 = vmin.f32 %v1127, 5.0
      %v1132 = vmin.f32 %v1128, 5.0
      %v1133 = vmul.f32 %v1129, 1.442695
      %v1134 = vpow.pop %v1133
      %v1135 = vmul.f32 %v1130, 1.442695
      %v1136 = vpow.pop %v1135
      %v1137 = vmul.f32 %v1131, 1.442695
      %v1138 = vpow.pop %v1137
      %v1139 = vmul.f32 %v1132, 1.442695
      %v1140 = vpow.pop %v1139
      %1145 = vrot.lane.b32.xlu0 %v1134, 16
      %v1146 = vpop.permute.xlu0 %1145
      %1147 = vrot.lane.b32.xlu0 %v1136, 16
      %v1148 = vpop.permute.xlu0 %1147
      %1149 = vrot.lane.b32.xlu0 %v1138, 16
      %v1150 = vpop.permute.xlu0 %1149
      %1151 = vrot.lane.b32.xlu0 %v1140, 16
      %v1152 = vpop.permute.xlu0 %1151
      %v1157 = vmul.f32 %v282, %v1146
      %v1158 = vmul.f32 %v283, %v1148
      %v1159 = vmul.f32 %v284, %v1150
      %v1160 = vmul.f32 %v285, %v1152
      %1165 = vrot.lane.b32.xlu0 %v1114, 16
      %v1166 = vpop.permute.xlu0 %1165
      %1167 = vrot.lane.b32.xlu0 %v1117, 16
      %v1168 = vpop.permute.xlu0 %1167
      %1169 = vrot.lane.b32.xlu0 %v1120, 16
      %v1170 = vpop.permute.xlu0 %1169
      %1171 = vrot.lane.b32.xlu0 %v1123, 16
      %v1172 = vpop.permute.xlu0 %1171
      %v1177 = vadd.f32 %v1157, %v1166
      %v1178 = vadd.f32 %v1158, %v1168
      %v1179 = vadd.f32 %v1159, %v1170
      %v1180 = vadd.f32 %v1160, %v1172
      %1181 = vst.msk [vmem:[%s280] sm:$0xff] %vm302, %v721
      %1182 = vst.msk [vmem:[%s280 + $0x8] sm:$0xff] %vm302, %v722
      %1183 = vst.msk [vmem:[%s280 + $0x10] sm:$0xff] %vm302, %v723
      %1184 = vst.msk [vmem:[%s280 + $0x18] sm:$0xff] %vm302, %v724
      %vm1185 = vcmask 261248
      %1186 = vst.msk [vmem:[%s280] sm:$0xff] %vm1185, %v1177
      %1187 = vst.msk [vmem:[%s280 + $0x8] sm:$0xff] %vm1185, %v1178
      %1188 = vst.msk [vmem:[%s280 + $0x10] sm:$0xff] %vm1185, %v1179
      %1189 = vst.msk [vmem:[%s280 + $0x18] sm:$0xff] %vm1185, %v1180
      %s1190 = smul.u32 4, %s18
      %p1191 = scmp.lt.s32.totalorder %s1190, 15
      %s1192 = scalar_select %p1191, %s1190, 15
      %s1193 = smul.addr %s1192, 8
      %s1194 = scalar_lea.vmem %s7, %s1193
      // Predicated region
      $region49: #{_interaction_call.1} parent=47 // pred_check
        %p1195 = pneg %p188
      $region50: #{_interaction_call.1} parent=47 // pred_check_branch
        %1197 = sbr.rel (%p1195) target = $region52
      $region51: #{_interaction_call.1} parent=47 // pred_region
        %s1198 = smul.u32 4, %s18
      $region52: #{_interaction_call.1} parent=47 // pred_fallthru
        _
    $region48: #{_interaction_call.1} parent=5 // pred_fallthru
      _
    %p1199 = scmp.le.s32.totalorder 2, %s13
    // Predicated region
    $region53: #{_interaction_call.1} parent=5 // pred_check
      %p1200 = pneg %p1199
    $region54: #{_interaction_call.1} parent=5 // pred_check_branch
      %1202 = sbr.rel (%p1200) target = $region56
    $region55: #{_interaction_call.1} parent=5 // pred_region
      %s1203 = ssub.s32 %s13, 2
      // Predicated region
      $region57: #{_interaction_call.1} parent=55 // pred_check
        %p1204 = pneg %p194
      $region58: #{_interaction_call.1} parent=55 // pred_check_branch
        %1206 = sbr.rel (%p1204) target = $region60
      $region59: #{_interaction_call.1} parent=55 // pred_region
        %s1207 = smul.u32 4, %s19
        %p1208 = scmp.lt.s32.totalorder %s1207, 15
        %s1209 = scalar_select %p1208, %s1207, 15
        %s1210 = smul.addr %s1209, 8
        %s1211 = scalar_lea.vmem %s7, %s1210
      $region60: #{_interaction_call.1} parent=55 // pred_fallthru
        _
    $region56: #{_interaction_call.1} parent=5 // pred_fallthru
      _
  $region6: #{_interaction_call.1} parent=0 // loop_footer
    %s17 = sadd.s32 1, %s13
  $region7: #{_interaction_call.1} parent=0 // loop_footer_branch
    %12 = sbr.rel target = $region3
  $region8: #{_interaction_call.1} parent=0 // loop_exit
    _

</llo_original>
